<compile_context>
chip_gen: v7x
topology: tpu7x:2x2x1
jax: 0.10.0
libtpu: 0.0.40
codegen_flags: <defaults>
</compile_context>

<pallas_src>
import jax
import jax.numpy as jnp
import numpy as np
from jax import lax
from jax.experimental import pallas as pl
from jax.experimental.pallas import tpu as pltpu

EPS = 1e-5


# ------------------------------ Pallas kernel ------------------------------
def film_kernel(x_ref, y_ref, sdn_ref, sup_ref, t1_ref, t2_ref, b2_ref,
                wf_ref, bf_ref, s1_ref, s1t_ref, s2_ref, s2t_ref, o_ref):
    M = x_ref.shape[0]                    # B * H rows
    L2 = t2_ref.shape[2]                  # W * out_features (conv2 lane width)
    cout = s2_ref.shape[1]
    width = L2 // cout
    inv_n = 1.0 / float(M * width)        # elements per channel (batch stats)

    xv = x_ref[...]                                              # bf16 (M, W*Cin)
    sdn = sdn_ref[...]                                           # bf16 (M, M)
    sup = sup_ref[...]

    # ---- row shifts via 0/1 shift matrices on the MXU (exact selections) ----
    x_dn = jnp.dot(sdn, xv, preferred_element_type=jnp.float32).astype(jnp.bfloat16)
    x_up = jnp.dot(sup, xv, preferred_element_type=jnp.float32).astype(jnp.bfloat16)

    # ---- conv1: 3 width-Toeplitz matmuls (bf16 operands, f32 accumulation) ----
    acc1 = (jnp.dot(x_dn, t1_ref[0], preferred_element_type=jnp.float32)
            + jnp.dot(xv, t1_ref[1], preferred_element_type=jnp.float32)
            + jnp.dot(x_up, t1_ref[2], preferred_element_type=jnp.float32))
    # conv1 bias intentionally dropped: exactly cancelled by BN1 mean subtraction.

    # ---- bn1: one-pass batch statistics (sum / sumsq) + relu ----
    ls1 = jnp.sum(acc1, axis=0, keepdims=True)                   # (1, L1)
    lq1 = jnp.sum(acc1 * acc1, axis=0, keepdims=True)            # (1, L1)
    mean1 = jnp.dot(ls1, s1_ref[...], preferred_element_type=jnp.float32) * inv_n
    ex2_1 = jnp.dot(lq1, s1_ref[...], preferred_element_type=jnp.float32) * inv_n
    var1 = jnp.maximum(ex2_1 - mean1 * mean1, 0.0)               # clamp cancellation
    inv1 = lax.rsqrt(var1 + EPS)                                 # (1, imm)
    scale1 = jnp.dot(inv1, s1t_ref[...], preferred_element_type=jnp.float32)
    shift1 = jnp.dot(-mean1 * inv1, s1t_ref[...], preferred_element_type=jnp.float32)
    h1 = jnp.maximum(acc1 * scale1 + shift1, 0.0).astype(jnp.bfloat16)   # (M, L1) bf16

    # ---- conv2: shift matmuls + 3 Toeplitz matmuls, no VMEM scratch ----
    h1_dn = jnp.dot(sdn, h1, preferred_element_type=jnp.float32).astype(jnp.bfloat16)
    h1_up = jnp.dot(sup, h1, preferred_element_type=jnp.float32).astype(jnp.bfloat16)
    acc2 = (jnp.dot(h1_dn, t2_ref[0], preferred_element_type=jnp.float32)
            + jnp.dot(h1, t2_ref[1], preferred_element_type=jnp.float32)
            + jnp.dot(h1_up, t2_ref[2], preferred_element_type=jnp.float32))
    acc2 = acc2 + b2_ref[...]                                    # (1, L2) broadcast

    # ---- FiLM: single fused lane-broadcast linear (in_features -> 2*L2) ----
    fused = jnp.dot(y_ref[...], wf_ref[...],
                    preferred_element_type=jnp.float32) + bf_ref[...]     # (M, 2*L2)
    fw = fused[:, :L2]                                           # lane-tile aligned
    fb = fused[:, L2:]
    out = acc2 * fw + fb

    # ---- bn2 (one-pass stats, clamped variance) + relu; lane-dense store ----
    ls2 = jnp.sum(out, axis=0, keepdims=True)
    lq2 = jnp.sum(out * out, axis=0, keepdims=True)
    mean2 = jnp.dot(ls2, s2_ref[...], preferred_element_type=jnp.float32) * inv_n
    ex2_2 = jnp.dot(lq2, s2_ref[...], preferred_element_type=jnp.float32) * inv_n
    var2 = jnp.maximum(ex2_2 - mean2 * mean2, 0.0)
    inv2 = lax.rsqrt(var2 + EPS)
    scale2 = jnp.dot(inv2, s2t_ref[...], preferred_element_type=jnp.float32)
    shift2 = jnp.dot(-mean2 * inv2, s2t_ref[...], preferred_element_type=jnp.float32)
    o_ref[...] = jnp.maximum(out * scale2 + shift2, 0.0)


# --------------------- one-time parameter preparation ----------------------
def _toeplitz_conv_weights(w, width):
    """(3,3,Cin,Cout) conv weight -> (3, width*Cin, width*Cout).

    The dx taps and the SAME zero-padding along W are folded into the weight,
    so each dy tap of the 3x3 conv becomes one (W*Cin, W*Cout) matmul.
    """
    kh, kw, cin, cout = w.shape
    wn = np.asarray(w, np.float32)
    t = np.zeros((kh, width * cin, width * cout), np.float32)
    for dy in range(kh):
        for dx in range(kw):
            for wo in range(width):
                wi = wo + dx - 1
                if 0 <= wi < width:
                    t[dy, wi * cin:(wi + 1) * cin,
                      wo * cout:(wo + 1) * cout] = wn[dy, dx]
    return jnp.asarray(t)


def _channel_select(width, channels):
    """(width*channels, channels) 0/1 matrix: S[w*C + c, c] = 1."""
    return jnp.asarray(np.tile(np.eye(channels, dtype=np.float32), (width, 1)))


def _shift_matrices(batch, height):
    """0/1 shift matrices over flattened (B*H) rows with zeroed image edges.

    sdn: result row g <- row g-1 (zero where h == 0);      used for dy == 0
    sup: result row g <- row g+1 (zero where h == H-1);    used for dy == 2
    Boundary zeros implement the conv's SAME padding along H and prevent any
    leakage across batch samples.
    """
    m = batch * height
    sdn = np.zeros((m, m), np.float32)
    sup = np.zeros((m, m), np.float32)
    for b in range(batch):
        for h in range(height):
            g = b * height + h
            if h > 0:
                sdn[g, g - 1] = 1.0
            if h < height - 1:
                sup[g, g + 1] = 1.0
    return jnp.asarray(sdn, jnp.bfloat16), jnp.asarray(sup, jnp.bfloat16)


def prepare_params(params, width, height, batch):
    w1, _b1, w2, b2, ww, wb, bw, bb = params   # b1 dropped (cancelled by BN1)
    imm, cout = w1.shape[-1], w2.shape[-1]
    L2 = width * cout
    t1 = _toeplitz_conv_weights(w1, width).astype(jnp.bfloat16)
    t2 = _toeplitz_conv_weights(w2, width).astype(jnp.bfloat16)
    b2_lane = jnp.tile(b2, (width,)).reshape(1, L2).astype(jnp.float32)
    # lane-broadcast fused FiLM weights: fused[:, :L2] -> weight, [:, L2:] -> bias
    ww_lane = jnp.tile(ww.astype(jnp.float32), (1, width))            # (in, L2)
    bw_lane = jnp.tile(bw.astype(jnp.float32), (1, width))            # (in, L2)
    wf_lane = jnp.concatenate([ww_lane, bw_lane], axis=1)             # (in, 2*L2)
    bf_lane = jnp.concatenate([jnp.tile(wb, (width,)),
                               jnp.tile(bb, (width,))]).reshape(1, 2 * L2)
    bf_lane = bf_lane.astype(jnp.float32)
    s1 = _channel_select(width, imm)
    s2 = _channel_select(width, cout)
    sdn, sup = _shift_matrices(batch, height)
    return (t1, t2, b2_lane, wf_lane, bf_lane, s1, s1.T, s2, s2.T, sdn, sup)


# --------------------------------- wrapper ----------------------------------
@jax.jit
def film_forward(x_nchw, y, prepared):
    """x_nchw: (B, C_in, H, W) f32; y: (B, in_features) f32 -> (B, Cout, H, W)."""
    t1, t2, b2l, wfl, bfl, s1, s1t, s2, s2t, sdn, sup = prepared
    B, cin, H, W = x_nchw.shape
    cout = s2.shape[1]

    # NCHW -> flat lane-dense (B*H, W*Cin), bf16 for the MXU; the dx padding is
    # baked into the Toeplitz weights and the dy padding into the shift
    # matrices, so no host-side padding at all.
    x2 = jnp.transpose(x_nchw, (0, 2, 3, 1)).reshape(B * H, W * cin)
    x2 = x2.astype(jnp.bfloat16)
    yr = jnp.repeat(y, H, axis=0)                       # (B*H, in_features)

    vmem = pl.BlockSpec(memory_space=pltpu.MemorySpace.VMEM)
    out = pl.pallas_call(
        film_kernel,
        out_shape=jax.ShapeDtypeStruct((B * H, W * cout), jnp.float32),
        in_specs=[vmem] * 13,
        out_specs=vmem,
        compiler_params=pltpu.CompilerParams(vmem_limit_bytes=32 * 1024 * 1024),
    )(x2, yr, sdn, sup, t1, t2, b2l, wfl, bfl, s1, s1t, s2, s2t)

    # flat lane-dense (B*H, W*Cout) -> NCHW
    return jnp.transpose(out.reshape(B, H, W, cout), (0, 3, 1, 2))


# ------------------- deterministic parameter init (matches torch) ----------
def init_params(key, in_features, out_features, in_channels, imm_channels):
    ks = jax.random.split(key, 8)

    def conv_init(kw_, kb_, cin, cout):
        fan_in = cin * 9
        bound = 1.0 / np.sqrt(fan_in)
        w = jax.random.uniform(kw_, (3, 3, cin, cout), jnp.float32, -bound, bound)
        b = jax.random.uniform(kb_, (cout,), jnp.float32, -bound, bound)
        return w, b

    def linear_init(kw_, fin, fout):
        # initialize_parameters: N(0,1) rows normalized to unit L2 norm, bias=0
        w = jax.random.normal(kw_, (fout, fin), jnp.float32)
        w = w / jnp.sqrt(jnp.sum(w * w, axis=1, keepdims=True))
        return w.T, jnp.zeros((fout,), jnp.float32)          # stored as (fin,fout)

    w1, b1 = conv_init(ks[0], ks[1], in_channels, imm_channels)
    w2, b2 = conv_init(ks[2], ks[3], imm_channels, out_features)
    ww, wb = linear_init(ks[4], in_features, out_features)
    bw, bb = linear_init(ks[5], in_features, out_features)
    return (w1, b1, w2, b2, ww, wb, bw, bb)


# ------------------- pure-JAX f32 reference for validation -----------------
def film_ref(x_nchw, y, params):
    w1, b1, w2, b2, ww, wb, bw, bb = params
    x = jnp.transpose(x_nchw, (0, 2, 3, 1))
    dn = ('NHWC', 'HWIO', 'NHWC')

    def bn_relu(h):
        m = jnp.mean(h, axis=(0, 1, 2), keepdims=True)
        v = jnp.mean((h - m) ** 2, axis=(0, 1, 2), keepdims=True)
        return jnp.maximum((h - m) / jnp.sqrt(v + EPS), 0.0)

    h = lax.conv_general_dilated(x, w1, (1, 1), 'SAME', dimension_numbers=dn,
                                 precision=lax.Precision.HIGHEST) + b1
    h = bn_relu(h)
    h = lax.conv_general_dilated(h, w2, (1, 1), 'SAME', dimension_numbers=dn,
                                 precision=lax.Precision.HIGHEST) + b2
    fw = (jnp.dot(y, ww, precision=lax.Precision.HIGHEST) + wb)[:, None, None, :]
    fb = (jnp.dot(y, bw, precision=lax.Precision.HIGHEST) + bb)[:, None, None, :]
    out = bn_relu(h * fw + fb)
    return jnp.transpose(out, (0, 3, 1, 2))


if __name__ == "__main__":
    B, Cin, H, W = 2, 4, 16, 16
    in_features, out_features, imm_channels = 32, 16, 8

    key = jax.random.PRNGKey(0)
    kx, ky, kp = jax.random.split(key, 3)
    x = jax.random.normal(kx, (B, Cin, H, W), jnp.float32)
    y = jax.random.normal(ky, (B, in_features), jnp.float32)
    params = init_params(kp, in_features, out_features, Cin, imm_channels)
    prepared = prepare_params(params, W, H, B)

    out = jax.block_until_ready(film_forward(x, y, prepared))
    ref = jax.block_until_ready(film_ref(x, y, params))

    # Tolerance reflects bf16 MXU operands in the kernel vs. the f32 reference
    # (f32 accumulation; BN/FiLM elementwise math stays f32).
    np.testing.assert_allclose(np.asarray(out), np.asarray(ref),
                               rtol=5e-2, atol=5e-2)
    assert out.shape == (B, out_features, H, W)
    print("KERNEL_OK")
</pallas_src>

<mosaic_0001>
module attributes {stable_mosaic.version = 11 : i64} {
  func.func @film_kernel(%arg0: memref<32x64xbf16, #tpu.memory_space<vmem>>, %arg1: memref<32x32xf32, #tpu.memory_space<vmem>>, %arg2: memref<32x32xbf16, #tpu.memory_space<vmem>>, %arg3: memref<32x32xbf16, #tpu.memory_space<vmem>>, %arg4: memref<3x64x128xbf16, #tpu.memory_space<vmem>>, %arg5: memref<3x128x256xbf16, #tpu.memory_space<vmem>>, %arg6: memref<1x256xf32, #tpu.memory_space<vmem>>, %arg7: memref<32x512xf32, #tpu.memory_space<vmem>>, %arg8: memref<1x512xf32, #tpu.memory_space<vmem>>, %arg9: memref<128x8xf32, #tpu.memory_space<vmem>>, %arg10: memref<8x128xf32, #tpu.memory_space<vmem>>, %arg11: memref<256x16xf32, #tpu.memory_space<vmem>>, %arg12: memref<16x256xf32, #tpu.memory_space<vmem>>, %arg13: memref<32x256xf32, #tpu.memory_space<vmem>>) attributes {dimension_semantics = [], scalar_prefetch = 0 : i64, scratch_operands = 0 : i64, tpu.core_type = #tpu.core_type<tc>} {
    %c0 = arith.constant 0 : index
    %c0_0 = arith.constant 0 : index
    %0 = vector.load %arg0[%c0, %c0_0] : memref<32x64xbf16, #tpu.memory_space<vmem>>, vector<32x64xbf16>
    %c0_1 = arith.constant 0 : index
    %c0_2 = arith.constant 0 : index
    %1 = vector.load %arg2[%c0_1, %c0_2] : memref<32x32xbf16, #tpu.memory_space<vmem>>, vector<32x32xbf16>
    %c0_3 = arith.constant 0 : index
    %c0_4 = arith.constant 0 : index
    %2 = vector.load %arg3[%c0_3, %c0_4] : memref<32x32xbf16, #tpu.memory_space<vmem>>, vector<32x32xbf16>
    %cst = arith.constant dense<0.000000e+00> : vector<32x64xf32>
    %3 = tpu.matmul %1, %0, %cst {dimension_numbers = #tpu.dot_dimension_numbers<[1], [0], [0], [1], [0, 0, 1, 1], [], []>} : vector<32x32xbf16>, vector<32x64xbf16>, vector<32x64xf32> -> vector<32x64xf32>
    %4 = arith.truncf %3 : vector<32x64xf32> to vector<32x64xbf16>
    %cst_5 = arith.constant dense<0.000000e+00> : vector<32x64xf32>
    %5 = tpu.matmul %2, %0, %cst_5 {dimension_numbers = #tpu.dot_dimension_numbers<[1], [0], [0], [1], [0, 0, 1, 1], [], []>} : vector<32x32xbf16>, vector<32x64xbf16>, vector<32x64xf32> -> vector<32x64xf32>
    %6 = arith.truncf %5 : vector<32x64xf32> to vector<32x64xbf16>
    %c0_6 = arith.constant 0 : index
    %c0_7 = arith.constant 0 : index
    %c0_8 = arith.constant 0 : index
    %7 = vector.load %arg4[%c0_6, %c0_7, %c0_8] : memref<3x64x128xbf16, #tpu.memory_space<vmem>>, vector<1x64x128xbf16>
    %8 = vector.shape_cast %7 : vector<1x64x128xbf16> to vector<64x128xbf16>
    %cst_9 = arith.constant dense<0.000000e+00> : vector<32x128xf32>
    %9 = tpu.matmul %4, %8, %cst_9 {dimension_numbers = #tpu.dot_dimension_numbers<[1], [0], [0], [1], [0, 0, 1, 1], [], []>} : vector<32x64xbf16>, vector<64x128xbf16>, vector<32x128xf32> -> vector<32x128xf32>
    %c1 = arith.constant 1 : index
    %c0_10 = arith.constant 0 : index
    %c0_11 = arith.constant 0 : index
    %10 = vector.load %arg4[%c1, %c0_10, %c0_11] : memref<3x64x128xbf16, #tpu.memory_space<vmem>>, vector<1x64x128xbf16>
    %11 = vector.shape_cast %10 : vector<1x64x128xbf16> to vector<64x128xbf16>
    %cst_12 = arith.constant dense<0.000000e+00> : vector<32x128xf32>
    %12 = tpu.matmul %0, %11, %cst_12 {dimension_numbers = #tpu.dot_dimension_numbers<[1], [0], [0], [1], [0, 0, 1, 1], [], []>} : vector<32x64xbf16>, vector<64x128xbf16>, vector<32x128xf32> -> vector<32x128xf32>
    %13 = arith.addf %9, %12 : vector<32x128xf32>
    %c2 = arith.constant 2 : index
    %c0_13 = arith.constant 0 : index
    %c0_14 = arith.constant 0 : index
    %14 = vector.load %arg4[%c2, %c0_13, %c0_14] : memref<3x64x128xbf16, #tpu.memory_space<vmem>>, vector<1x64x128xbf16>
    %15 = vector.shape_cast %14 : vector<1x64x128xbf16> to vector<64x128xbf16>
    %cst_15 = arith.constant dense<0.000000e+00> : vector<32x128xf32>
    %16 = tpu.matmul %6, %15, %cst_15 {dimension_numbers = #tpu.dot_dimension_numbers<[1], [0], [0], [1], [0, 0, 1, 1], [], []>} : vector<32x64xbf16>, vector<64x128xbf16>, vector<32x128xf32> -> vector<32x128xf32>
    %17 = arith.addf %13, %16 : vector<32x128xf32>
    %cst_16 = arith.constant dense<0.000000e+00> : vector<128xf32>
    %18 = vector.multi_reduction <add>, %17, %cst_16 [0] : vector<32x128xf32> to vector<128xf32>
    %19 = vector.shape_cast %18 : vector<128xf32> to vector<1x128xf32>
    %20 = arith.mulf %17, %17 : vector<32x128xf32>
    %cst_17 = arith.constant dense<0.000000e+00> : vector<128xf32>
    %21 = vector.multi_reduction <add>, %20, %cst_17 [0] : vector<32x128xf32> to vector<128xf32>
    %22 = vector.shape_cast %21 : vector<128xf32> to vector<1x128xf32>
    %c0_18 = arith.constant 0 : index
    %c0_19 = arith.constant 0 : index
    %23 = vector.load %arg9[%c0_18, %c0_19] : memref<128x8xf32, #tpu.memory_space<vmem>>, vector<128x8xf32>
    %cst_20 = arith.constant dense<0.000000e+00> : vector<1x8xf32>
    %24 = tpu.matmul %19, %23, %cst_20 {dimension_numbers = #tpu.dot_dimension_numbers<[1], [0], [0], [1], [0, 0, 1, 1], [], []>} : vector<1x128xf32>, vector<128x8xf32>, vector<1x8xf32> -> vector<1x8xf32>
    %cst_21 = arith.constant 0.001953125 : f32
    %25 = vector.broadcast %cst_21 : f32 to vector<1x8xf32>
    %26 = arith.mulf %24, %25 : vector<1x8xf32>
    %c0_22 = arith.constant 0 : index
    %c0_23 = arith.constant 0 : index
    %27 = vector.load %arg9[%c0_22, %c0_23] : memref<128x8xf32, #tpu.memory_space<vmem>>, vector<128x8xf32>
    %cst_24 = arith.constant dense<0.000000e+00> : vector<1x8xf32>
    %28 = tpu.matmul %22, %27, %cst_24 {dimension_numbers = #tpu.dot_dimension_numbers<[1], [0], [0], [1], [0, 0, 1, 1], [], []>} : vector<1x128xf32>, vector<128x8xf32>, vector<1x8xf32> -> vector<1x8xf32>
    %cst_25 = arith.constant 0.001953125 : f32
    %29 = vector.broadcast %cst_25 : f32 to vector<1x8xf32>
    %30 = arith.mulf %28, %29 : vector<1x8xf32>
    %31 = arith.mulf %26, %26 : vector<1x8xf32>
    %32 = arith.subf %30, %31 : vector<1x8xf32>
    %cst_26 = arith.constant 0.000000e+00 : f32
    %33 = vector.broadcast %cst_26 : f32 to vector<1x8xf32>
    %34 = arith.maximumf %32, %33 : vector<1x8xf32>
    %cst_27 = arith.constant 9.99999974E-6 : f32
    %35 = vector.broadcast %cst_27 : f32 to vector<1x8xf32>
    %36 = arith.addf %34, %35 : vector<1x8xf32>
    %37 = math.rsqrt %36 : vector<1x8xf32>
    %c0_28 = arith.constant 0 : index
    %c0_29 = arith.constant 0 : index
    %38 = vector.load %arg10[%c0_28, %c0_29] : memref<8x128xf32, #tpu.memory_space<vmem>>, vector<8x128xf32>
    %cst_30 = arith.constant dense<0.000000e+00> : vector<1x128xf32>
    %39 = tpu.matmul %37, %38, %cst_30 {dimension_numbers = #tpu.dot_dimension_numbers<[1], [0], [0], [1], [0, 0, 1, 1], [], []>} : vector<1x8xf32>, vector<8x128xf32>, vector<1x128xf32> -> vector<1x128xf32>
    %cst_31 = arith.constant 0.000000e+00 : f32
    %40 = vector.broadcast %cst_31 : f32 to vector<1x8xf32>
    %41 = arith.subf %40, %26 : vector<1x8xf32>
    %42 = arith.mulf %41, %37 : vector<1x8xf32>
    %c0_32 = arith.constant 0 : index
    %c0_33 = arith.constant 0 : index
    %43 = vector.load %arg10[%c0_32, %c0_33] : memref<8x128xf32, #tpu.memory_space<vmem>>, vector<8x128xf32>
    %cst_34 = arith.constant dense<0.000000e+00> : vector<1x128xf32>
    %44 = tpu.matmul %42, %43, %cst_34 {dimension_numbers = #tpu.dot_dimension_numbers<[1], [0], [0], [1], [0, 0, 1, 1], [], []>} : vector<1x8xf32>, vector<8x128xf32>, vector<1x128xf32> -> vector<1x128xf32>
    %45 = vector.broadcast %39 : vector<1x128xf32> to vector<32x128xf32>
    %46 = arith.mulf %17, %45 : vector<32x128xf32>
    %47 = vector.broadcast %44 : vector<1x128xf32> to vector<32x128xf32>
    %48 = arith.addf %46, %47 : vector<32x128xf32>
    %cst_35 = arith.constant 0.000000e+00 : f32
    %49 = vector.broadcast %cst_35 : f32 to vector<32x128xf32>
    %50 = arith.maximumf %48, %49 : vector<32x128xf32>
    %51 = arith.truncf %50 : vector<32x128xf32> to vector<32x128xbf16>
    %cst_36 = arith.constant dense<0.000000e+00> : vector<32x128xf32>
    %52 = tpu.matmul %1, %51, %cst_36 {dimension_numbers = #tpu.dot_dimension_numbers<[1], [0], [0], [1], [0, 0, 1, 1], [], []>} : vector<32x32xbf16>, vector<32x128xbf16>, vector<32x128xf32> -> vector<32x128xf32>
    %53 = arith.truncf %52 : vector<32x128xf32> to vector<32x128xbf16>
    %cst_37 = arith.constant dense<0.000000e+00> : vector<32x128xf32>
    %54 = tpu.matmul %2, %51, %cst_37 {dimension_numbers = #tpu.dot_dimension_numbers<[1], [0], [0], [1], [0, 0, 1, 1], [], []>} : vector<32x32xbf16>, vector<32x128xbf16>, vector<32x128xf32> -> vector<32x128xf32>
    %55 = arith.truncf %54 : vector<32x128xf32> to vector<32x128xbf16>
    %c0_38 = arith.constant 0 : index
    %c0_39 = arith.constant 0 : index
    %c0_40 = arith.constant 0 : index
    %56 = vector.load %arg5[%c0_38, %c0_39, %c0_40] : memref<3x128x256xbf16, #tpu.memory_space<vmem>>, vector<1x128x256xbf16>
    %57 = vector.shape_cast %56 : vector<1x128x256xbf16> to vector<128x256xbf16>
    %cst_41 = arith.constant dense<0.000000e+00> : vector<32x256xf32>
    %58 = tpu.matmul %53, %57, %cst_41 {dimension_numbers = #tpu.dot_dimension_numbers<[1], [0], [0], [1], [0, 0, 1, 1], [], []>} : vector<32x128xbf16>, vector<128x256xbf16>, vector<32x256xf32> -> vector<32x256xf32>
    %c1_42 = arith.constant 1 : index
    %c0_43 = arith.constant 0 : index
    %c0_44 = arith.constant 0 : index
    %59 = vector.load %arg5[%c1_42, %c0_43, %c0_44] : memref<3x128x256xbf16, #tpu.memory_space<vmem>>, vector<1x128x256xbf16>
    %60 = vector.shape_cast %59 : vector<1x128x256xbf16> to vector<128x256xbf16>
    %cst_45 = arith.constant dense<0.000000e+00> : vector<32x256xf32>
    %61 = tpu.matmul %51, %60, %cst_45 {dimension_numbers = #tpu.dot_dimension_numbers<[1], [0], [0], [1], [0, 0, 1, 1], [], []>} : vector<32x128xbf16>, vector<128x256xbf16>, vector<32x256xf32> -> vector<32x256xf32>
    %62 = arith.addf %58, %61 : vector<32x256xf32>
    %c2_46 = arith.constant 2 : index
    %c0_47 = arith.constant 0 : index
    %c0_48 = arith.constant 0 : index
    %63 = vector.load %arg5[%c2_46, %c0_47, %c0_48] : memref<3x128x256xbf16, #tpu.memory_space<vmem>>, vector<1x128x256xbf16>
    %64 = vector.shape_cast %63 : vector<1x128x256xbf16> to vector<128x256xbf16>
    %cst_49 = arith.constant dense<0.000000e+00> : vector<32x256xf32>
    %65 = tpu.matmul %55, %64, %cst_49 {dimension_numbers = #tpu.dot_dimension_numbers<[1], [0], [0], [1], [0, 0, 1, 1], [], []>} : vector<32x128xbf16>, vector<128x256xbf16>, vector<32x256xf32> -> vector<32x256xf32>
    %66 = arith.addf %62, %65 : vector<32x256xf32>
    %c0_50 = arith.constant 0 : index
    %c0_51 = arith.constant 0 : index
    %67 = vector.load %arg6[%c0_50, %c0_51] : memref<1x256xf32, #tpu.memory_space<vmem>>, vector<1x256xf32>
    %68 = vector.broadcast %67 : vector<1x256xf32> to vector<32x256xf32>
    %69 = arith.addf %66, %68 : vector<32x256xf32>
    %c0_52 = arith.constant 0 : index
    %c0_53 = arith.constant 0 : index
    %70 = vector.load %arg1[%c0_52, %c0_53] : memref<32x32xf32, #tpu.memory_space<vmem>>, vector<32x32xf32>
    %c0_54 = arith.constant 0 : index
    %c0_55 = arith.constant 0 : index
    %71 = vector.load %arg7[%c0_54, %c0_55] : memref<32x512xf32, #tpu.memory_space<vmem>>, vector<32x512xf32>
    %cst_56 = arith.constant dense<0.000000e+00> : vector<32x512xf32>
    %72 = tpu.matmul %70, %71, %cst_56 {dimension_numbers = #tpu.dot_dimension_numbers<[1], [0], [0], [1], [0, 0, 1, 1], [], []>} : vector<32x32xf32>, vector<32x512xf32>, vector<32x512xf32> -> vector<32x512xf32>
    %c0_57 = arith.constant 0 : index
    %c0_58 = arith.constant 0 : index
    %73 = vector.load %arg8[%c0_57, %c0_58] : memref<1x512xf32, #tpu.memory_space<vmem>>, vector<1x512xf32>
    %74 = vector.broadcast %73 : vector<1x512xf32> to vector<32x512xf32>
    %75 = arith.addf %72, %74 : vector<32x512xf32>
    %76 = vector.extract_strided_slice %75 {offsets = [0, 0], sizes = [32, 256], strides = [1, 1]} : vector<32x512xf32> to vector<32x256xf32>
    %77 = vector.extract_strided_slice %75 {offsets = [0, 256], sizes = [32, 256], strides = [1, 1]} : vector<32x512xf32> to vector<32x256xf32>
    %78 = arith.mulf %69, %76 : vector<32x256xf32>
    %79 = arith.addf %78, %77 : vector<32x256xf32>
    %cst_59 = arith.constant dense<0.000000e+00> : vector<256xf32>
    %80 = vector.multi_reduction <add>, %79, %cst_59 [0] : vector<32x256xf32> to vector<256xf32>
    %81 = vector.shape_cast %80 : vector<256xf32> to vector<1x256xf32>
    %82 = arith.mulf %79, %79 : vector<32x256xf32>
    %cst_60 = arith.constant dense<0.000000e+00> : vector<256xf32>
    %83 = vector.multi_reduction <add>, %82, %cst_60 [0] : vector<32x256xf32> to vector<256xf32>
    %84 = vector.shape_cast %83 : vector<256xf32> to vector<1x256xf32>
    %c0_61 = arith.constant 0 : index
    %c0_62 = arith.constant 0 : index
    %85 = vector.load %arg11[%c0_61, %c0_62] : memref<256x16xf32, #tpu.memory_space<vmem>>, vector<256x16xf32>
    %cst_63 = arith.constant dense<0.000000e+00> : vector<1x16xf32>
    %86 = tpu.matmul %81, %85, %cst_63 {dimension_numbers = #tpu.dot_dimension_numbers<[1], [0], [0], [1], [0, 0, 1, 1], [], []>} : vector<1x256xf32>, vector<256x16xf32>, vector<1x16xf32> -> vector<1x16xf32>
    %cst_64 = arith.constant 0.001953125 : f32
    %87 = vector.broadcast %cst_64 : f32 to vector<1x16xf32>
    %88 = arith.mulf %86, %87 : vector<1x16xf32>
    %c0_65 = arith.constant 0 : index
    %c0_66 = arith.constant 0 : index
    %89 = vector.load %arg11[%c0_65, %c0_66] : memref<256x16xf32, #tpu.memory_space<vmem>>, vector<256x16xf32>
    %cst_67 = arith.constant dense<0.000000e+00> : vector<1x16xf32>
    %90 = tpu.matmul %84, %89, %cst_67 {dimension_numbers = #tpu.dot_dimension_numbers<[1], [0], [0], [1], [0, 0, 1, 1], [], []>} : vector<1x256xf32>, vector<256x16xf32>, vector<1x16xf32> -> vector<1x16xf32>
    %cst_68 = arith.constant 0.001953125 : f32
    %91 = vector.broadcast %cst_68 : f32 to vector<1x16xf32>
    %92 = arith.mulf %90, %91 : vector<1x16xf32>
    %93 = arith.mulf %88, %88 : vector<1x16xf32>
    %94 = arith.subf %92, %93 : vector<1x16xf32>
    %cst_69 = arith.constant 0.000000e+00 : f32
    %95 = vector.broadcast %cst_69 : f32 to vector<1x16xf32>
    %96 = arith.maximumf %94, %95 : vector<1x16xf32>
    %cst_70 = arith.constant 9.99999974E-6 : f32
    %97 = vector.broadcast %cst_70 : f32 to vector<1x16xf32>
    %98 = arith.addf %96, %97 : vector<1x16xf32>
    %99 = math.rsqrt %98 : vector<1x16xf32>
    %c0_71 = arith.constant 0 : index
    %c0_72 = arith.constant 0 : index
    %100 = vector.load %arg12[%c0_71, %c0_72] : memref<16x256xf32, #tpu.memory_space<vmem>>, vector<16x256xf32>
    %cst_73 = arith.constant dense<0.000000e+00> : vector<1x256xf32>
    %101 = tpu.matmul %99, %100, %cst_73 {dimension_numbers = #tpu.dot_dimension_numbers<[1], [0], [0], [1], [0, 0, 1, 1], [], []>} : vector<1x16xf32>, vector<16x256xf32>, vector<1x256xf32> -> vector<1x256xf32>
    %cst_74 = arith.constant 0.000000e+00 : f32
    %102 = vector.broadcast %cst_74 : f32 to vector<1x16xf32>
    %103 = arith.subf %102, %88 : vector<1x16xf32>
    %104 = arith.mulf %103, %99 : vector<1x16xf32>
    %c0_75 = arith.constant 0 : index
    %c0_76 = arith.constant 0 : index
    %105 = vector.load %arg12[%c0_75, %c0_76] : memref<16x256xf32, #tpu.memory_space<vmem>>, vector<16x256xf32>
    %cst_77 = arith.constant dense<0.000000e+00> : vector<1x256xf32>
    %106 = tpu.matmul %104, %105, %cst_77 {dimension_numbers = #tpu.dot_dimension_numbers<[1], [0], [0], [1], [0, 0, 1, 1], [], []>} : vector<1x16xf32>, vector<16x256xf32>, vector<1x256xf32> -> vector<1x256xf32>
    %107 = vector.broadcast %101 : vector<1x256xf32> to vector<32x256xf32>
    %108 = arith.mulf %79, %107 : vector<32x256xf32>
    %109 = vector.broadcast %106 : vector<1x256xf32> to vector<32x256xf32>
    %110 = arith.addf %108, %109 : vector<32x256xf32>
    %cst_78 = arith.constant 0.000000e+00 : f32
    %111 = vector.broadcast %cst_78 : f32 to vector<32x256xf32>
    %112 = arith.maximumf %110, %111 : vector<32x256xf32>
    %c0_79 = arith.constant 0 : index
    %c0_80 = arith.constant 0 : index
    %113 = vector.load %arg13[%c0_79, %c0_80] : memref<32x256xf32, #tpu.memory_space<vmem>>, vector<32x256xf32>
    tpu.vector_store %arg13[%c0_79, %c0_80], %112 {strides = array<i32>} : memref<32x256xf32, #tpu.memory_space<vmem>>, vector<32x256xf32>,
    return
  }
}

</mosaic_0001>

<llo_original>
// kernel: film_forward.1
$region0: #{film_forward.1}
  #allocation0 [shape = 'u32[]', space=smem, size = 0x4, offset = 0x4, fixed_abs, tag = 'smem constant byte address 0x4 - core index']
  #allocation1 [shape = 'u32[144,128]{1,0:T(1,128)}', space=vmem, size = 0x12000, scoped, tag = 'internal scratch']
  %s0 = inlined_call_operand.vmem [shape: bf16[32,64], index: 0, kind: input, shape index: {}]
  %s1 = inlined_call_operand.vmem [shape: f32[32,32], index: 1, kind: input, shape index: {}]
  %s2 = inlined_call_operand.vmem [shape: bf16[32,32], index: 2, kind: input, shape index: {}]
  %s3 = inlined_call_operand.vmem [shape: bf16[32,32], index: 3, kind: input, shape index: {}]
  %s4 = inlined_call_operand.vmem [shape: bf16[3,64,128], index: 4, kind: input, shape index: {}]
  %s5 = inlined_call_operand.vmem [shape: bf16[3,128,256], index: 5, kind: input, shape index: {}]
  %s6 = inlined_call_operand.vmem [shape: f32[1,256], index: 6, kind: input, shape index: {}]
  %s7 = inlined_call_operand.vmem [shape: f32[32,512], index: 7, kind: input, shape index: {}]
  %s8 = inlined_call_operand.vmem [shape: f32[1,512], index: 8, kind: input, shape index: {}]
  %s9 = inlined_call_operand.vmem [shape: f32[128,8], index: 9, kind: input, shape index: {}]
  %s10 = inlined_call_operand.vmem [shape: f32[8,128], index: 10, kind: input, shape index: {}]
  %s11 = inlined_call_operand.vmem [shape: f32[256,16], index: 11, kind: input, shape index: {}]
  %s12 = inlined_call_operand.vmem [shape: f32[16,256], index: 12, kind: input, shape index: {}]
  %s13 = inlined_call_operand.vmem [shape: f32[32,256], index: 13, kind: output, shape index: {}]
  %s14 = sld [smem:[#allocation0]]
  $region62: #{film_forward.1} parent=0
    _
  %s16 = ssub.s32 1, %s14
  %s17 = scalar_select 0, %s16, %s14
  // Predicated region
  $region2: #{film_forward.1} parent=0 // pred_check
    _
  $region3: #{film_forward.1} parent=0 // pred_check_branch
    %19 = sbr.rel (0) target = $region5
  $region4: #{film_forward.1} parent=0 // pred_region
    _
  $region5: #{film_forward.1} parent=0 // pred_fallthru
    _
  // Predicated region
  $region6: #{film_forward.1} parent=0 // pred_check
    _
  $region7: #{film_forward.1} parent=0 // pred_check_branch
    %21 = sbr.rel (0) target = $region9
  $region8: #{film_forward.1} parent=0 // pred_region
    _
  $region9: #{film_forward.1} parent=0 // pred_fallthru
    _
  // Predicated region
  $region10: #{film_forward.1} parent=0 // pred_check
    _
  $region11: #{film_forward.1} parent=0 // pred_check_branch
    %23 = sbr.rel (0) target = $region13
  $region12: #{film_forward.1} parent=0 // pred_region
    _
  $region13: #{film_forward.1} parent=0 // pred_fallthru
    _
  // Predicated region
  $region14: #{film_forward.1} parent=0 // pred_check
    _
  $region15: #{film_forward.1} parent=0 // pred_check_branch
    %25 = sbr.rel (0) target = $region17
  $region16: #{film_forward.1} parent=0 // pred_region
    _
  $region17: #{film_forward.1} parent=0 // pred_fallthru
    _
  // Predicated region
  $region18: #{film_forward.1} parent=0 // pred_check
    _
  $region19: #{film_forward.1} parent=0 // pred_check_branch
    %27 = sbr.rel (0) target = $region21
  $region20: #{film_forward.1} parent=0 // pred_region
    _
  $region21: #{film_forward.1} parent=0 // pred_fallthru
    _
  // Predicated region
  $region22: #{film_forward.1} parent=0 // pred_check
    _
  $region23: #{film_forward.1} parent=0 // pred_check_branch
    %29 = sbr.rel (0) target = $region25
  $region24: #{film_forward.1} parent=0 // pred_region
    _
  $region25: #{film_forward.1} parent=0 // pred_fallthru
    _
  // Predicated region
  $region26: #{film_forward.1} parent=0 // pred_check
    _
  $region27: #{film_forward.1} parent=0 // pred_check_branch
    %31 = sbr.rel (0) target = $region29
  $region28: #{film_forward.1} parent=0 // pred_region
    _
  $region29: #{film_forward.1} parent=0 // pred_fallthru
    _
  // Predicated region
  $region30: #{film_forward.1} parent=0 // pred_check
    _
  $region31: #{film_forward.1} parent=0 // pred_check_branch
    %33 = sbr.rel (0) target = $region33
  $region32: #{film_forward.1} parent=0 // pred_region
    _
  $region33: #{film_forward.1} parent=0 // pred_fallthru
    _
  // Predicated region
  $region34: #{film_forward.1} parent=0 // pred_check
    _
  $region35: #{film_forward.1} parent=0 // pred_check_branch
    %35 = sbr.rel (0) target = $region37
  $region36: #{film_forward.1} parent=0 // pred_region
    _
  $region37: #{film_forward.1} parent=0 // pred_fallthru
    _
  // Predicated region
  $region38: #{film_forward.1} parent=0 // pred_check
    _
  $region39: #{film_forward.1} parent=0 // pred_check_branch
    %37 = sbr.rel (0) target = $region41
  $region40: #{film_forward.1} parent=0 // pred_region
    _
  $region41: #{film_forward.1} parent=0 // pred_fallthru
    _
  // Predicated region
  $region42: #{film_forward.1} parent=0 // pred_check
    _
  $region43: #{film_forward.1} parent=0 // pred_check_branch
    %39 = sbr.rel (0) target = $region45
  $region44: #{film_forward.1} parent=0 // pred_region
    _
  $region45: #{film_forward.1} parent=0 // pred_fallthru
    _
  // Predicated region
  $region46: #{film_forward.1} parent=0 // pred_check
    _
  $region47: #{film_forward.1} parent=0 // pred_check_branch
    %41 = sbr.rel (0) target = $region49
  $region48: #{film_forward.1} parent=0 // pred_region
    _
  $region49: #{film_forward.1} parent=0 // pred_fallthru
    _
  // Predicated region
  $region50: #{film_forward.1} parent=0 // pred_check
    _
  $region51: #{film_forward.1} parent=0 // pred_check_branch
    %43 = sbr.rel (0) target = $region53
  $region52: #{film_forward.1} parent=0 // pred_region
    _
  $region53: #{film_forward.1} parent=0 // pred_fallthru
    _
  %v45 = vld [vmem:[%s0] sm:$0xf]
  %v46 = vld [vmem:[%s0 + $0x4] sm:$0xf]
  %v47 = vld [vmem:[%s0 + $0x8] sm:$0xf]
  %v48 = vld [vmem:[%s0 + $0xc] sm:$0xf]
  %v49 = vld [vmem:[%s2] sm:$0xf]
  %v50 = vld [vmem:[%s2 + $0x4] sm:$0xf]
  %v51 = vld [vmem:[%s2 + $0x8] sm:$0xf]
  %v52 = vld [vmem:[%s2 + $0xc] sm:$0xf]
  %v53 = vld [vmem:[%s3] sm:$0xf]
  %v54 = vld [vmem:[%s3 + $0x4] sm:$0xf]
  %v55 = vld [vmem:[%s3 + $0x8] sm:$0xf]
  %v56 = vld [vmem:[%s3 + $0xc] sm:$0xf]
  %v61 = vunpack.c.l.b16 %v49
  %v62 = vunpack.c.l.b16 %v50
  %v63 = vunpack.c.l.b16 %v51
  %v64 = vunpack.c.l.b16 %v52
  %v65 = vpack.c.b16 %v62, %v61
  %v66 = vpack.c.b16 %v64, %v63
  %v71 = vunpack.c.l.b16 %v45
  %v72 = vunpack.c.l.b16 %v46
  %v73 = vunpack.c.l.b16 %v47
  %v74 = vunpack.c.l.b16 %v48
  %v75 = vpack.c.b16 %v72, %v71
  %v76 = vpack.c.b16 %v74, %v73
  %vm79 = vcmask 261120
  %v81 = vsel %vm79, %v65, 0
  %v84 = vsel %vm79, %v66, 0
  %86 = vmatprep.subr.bf16.mxu0 0
  %87 = vmatpush1.bf16.msra.mxu0 %v75
  %88 = vmatprep.subr.bf16.mxu0 0
  %89 = vmatpush1.bf16.msra.mxu0 %v76
  %90 = vmatprep.subr.bf16.mxu0 0
  %91 = vmatpush1.bf16.msra.mxu0 0
  %92 = vmatprep.subr.bf16.mxu0 0
  %93 = vmatpush1.bf16.msra.mxu0 0
  %94 = vmatprep.subr.bf16.mxu0 0
  %95 = vmatpush1.bf16.msra.mxu0 0
  %96 = vmatprep.subr.bf16.mxu0 0
  %97 = vmatpush1.bf16.msra.mxu0 0
  %98 = vmatprep.subr.bf16.mxu0 0
  %99 = vmatpush1.bf16.msra.mxu0 0
  %100 = vmatprep.subr.bf16.mxu0 0
  %101 = vmatpush1.bf16.msra.mxu0 0
  %102 = vmatprep.subr.bf16.mxu0 0
  %103 = vmatpush1.bf16.msra.mxu0 0
  %104 = vmatprep.subr.bf16.mxu0 0
  %105 = vmatpush1.bf16.msra.mxu0 0
  %106 = vmatprep.subr.bf16.mxu0 0
  %107 = vmatpush1.bf16.msra.mxu0 0
  %108 = vmatprep.subr.bf16.mxu0 0
  %109 = vmatpush1.bf16.msra.mxu0 0
  %110 = vmatprep.subr.bf16.mxu0 0
  %111 = vmatpush1.bf16.msra.mxu0 0
  %112 = vmatprep.subr.bf16.mxu0 0
  %113 = vmatpush1.bf16.msra.mxu0 0
  %114 = vmatprep.subr.bf16.mxu0 0
  %115 = vmatpush1.bf16.msra.mxu0 0
  %116 = vmatprep.subr.bf16.mxu0 0
  %117 = vmatpush1.bf16.msra.mxu0 0
  %118 = vmatprep.mubr.bf16.mxu0 0
  %119 = vmatmul.mubr.bf16.gmra.mrb[0].mxu0 %v81
  %v120 = vpop.f32.mrb[0].mxu0
  %v121 = vadd.f32 0.0, %v120
  %v122 = vpop.f32.mrb[0].mxu0
  %v123 = vpop.f32.mrb[0].mxu0
  %v124 = vadd.f32 0.0, %v123
  %v125 = vpop.f32.mrb[0].mxu0
  %126 = vmatprep.mubr.bf16.mxu0 0
  %127 = vmatmul.mubr.bf16.gmra.mrb[0].mxu0 %v84
  %v128 = vpop.f32.mrb[0].mxu0
  %v129 = vadd.f32 0.0, %v128
  %v130 = vpop.f32.mrb[0].mxu0
  %v131 = vpop.f32.mrb[0].mxu0
  %v132 = vadd.f32 0.0, %v131
  %v133 = vpop.f32.mrb[0].mxu0
  %134 = vdwg.mxu0
  %v135 = vpack.c.bf16 %v124, %v121
  %v136 = vpack.c.bf16 %v132, %v129
  %v141 = vunpack.c.l.b16 %v53
  %v142 = vunpack.c.l.b16 %v54
  %v143 = vunpack.c.l.b16 %v55
  %v144 = vunpack.c.l.b16 %v56
  %v145 = vpack.c.b16 %v142, %v141
  %v146 = vpack.c.b16 %v144, %v143
  %v148 = vsel %vm79, %v145, 0
  %v151 = vsel %vm79, %v146, 0
  %153 = vmatprep.subr.bf16.mxu0 0
  %154 = vmatpush1.bf16.msra.mxu0 %v75
  %155 = vmatprep.subr.bf16.mxu0 0
  %156 = vmatpush1.bf16.msra.mxu0 %v76
  %157 = vmatprep.subr.bf16.mxu0 0
  %158 = vmatpush1.bf16.msra.mxu0 0
  %159 = vmatprep.subr.bf16.mxu0 0
  %160 = vmatpush1.bf16.msra.mxu0 0
  %161 = vmatprep.subr.bf16.mxu0 0
  %162 = vmatpush1.bf16.msra.mxu0 0
  %163 = vmatprep.subr.bf16.mxu0 0
  %164 = vmatpush1.bf16.msra.mxu0 0
  %165 = vmatprep.subr.bf16.mxu0 0
  %166 = vmatpush1.bf16.msra.mxu0 0
  %167 = vmatprep.subr.bf16.mxu0 0
  %168 = vmatpush1.bf16.msra.mxu0 0
  %169 = vmatprep.subr.bf16.mxu0 0
  %170 = vmatpush1.bf16.msra.mxu0 0
  %171 = vmatprep.subr.bf16.mxu0 0
  %172 = vmatpush1.bf16.msra.mxu0 0
  %173 = vmatprep.subr.bf16.mxu0 0
  %174 = vmatpush1.bf16.msra.mxu0 0
  %175 = vmatprep.subr.bf16.mxu0 0
  %176 = vmatpush1.bf16.msra.mxu0 0
  %177 = vmatprep.subr.bf16.mxu0 0
  %178 = vmatpush1.bf16.msra.mxu0 0
  %179 = vmatprep.subr.bf16.mxu0 0
  %180 = vmatpush1.bf16.msra.mxu0 0
  %181 = vmatprep.subr.bf16.mxu0 0
  %182 = vmatpush1.bf16.msra.mxu0 0
  %183 = vmatprep.subr.bf16.mxu0 0
  %184 = vmatpush1.bf16.msra.mxu0 0
  %185 = vmatprep.mubr.bf16.mxu0 0
  %186 = vmatmul.mubr.bf16.gmra.mrb[0].mxu0 %v148
  %v187 = vpop.f32.mrb[0].mxu0
  %v188 = vadd.f32 0.0, %v187
  %v189 = vpop.f32.mrb[0].mxu0
  %v190 = vpop.f32.mrb[0].mxu0
  %v191 = vadd.f32 0.0, %v190
  %v192 = vpop.f32.mrb[0].mxu0
  %193 = vmatprep.mubr.bf16.mxu0 0
  %194 = vmatmul.mubr.bf16.gmra.mrb[0].mxu0 %v151
  %v195 = vpop.f32.mrb[0].mxu0
  %v196 = vadd.f32 0.0, %v195
  %v197 = vpop.f32.mrb[0].mxu0
  %v198 = vpop.f32.mrb[0].mxu0
  %v199 = vadd.f32 0.0, %v198
  %v200 = vpop.f32.mrb[0].mxu0
  %201 = vdwg.mxu0
  %v202 = vpack.c.bf16 %v191, %v188
  %v203 = vpack.c.bf16 %v199, %v196
  %v204 = vld [vmem:[%s4] sm:$0xf]
  %v205 = vld [vmem:[%s4 + $0x4] sm:$0xf]
  %v206 = vld [vmem:[%s4 + $0x8] sm:$0xf]
  %v207 = vld [vmem:[%s4 + $0xc] sm:$0xf]
  %v208 = vld [vmem:[%s4 + $0x10] sm:$0xf]
  %v209 = vld [vmem:[%s4 + $0x14] sm:$0xf]
  %v210 = vld [vmem:[%s4 + $0x18] sm:$0xf]
  %v211 = vld [vmem:[%s4 + $0x1c] sm:$0xf]
  %s212 = scalar_lea.vmem %s4, 32
  %v213 = vld [vmem:[%s212] sm:$0xf]
  %v214 = vld [vmem:[%s212 + $0x4] sm:$0xf]
  %v215 = vld [vmem:[%s212 + $0x8] sm:$0xf]
  %v216 = vld [vmem:[%s212 + $0xc] sm:$0xf]
  %v217 = vld [vmem:[%s212 + $0x10] sm:$0xf]
  %v218 = vld [vmem:[%s212 + $0x14] sm:$0xf]
  %v219 = vld [vmem:[%s212 + $0x18] sm:$0xf]
  %v220 = vld [vmem:[%s212 + $0x1c] sm:$0xf]
  %v229 = vunpack.c.l.b16 %v213
  %v230 = vunpack.c.l.b16 %v214
  %v231 = vunpack.c.l.b16 %v215
  %v232 = vunpack.c.l.b16 %v216
  %v233 = vunpack.c.l.b16 %v217
  %v234 = vunpack.c.l.b16 %v218
  %v235 = vunpack.c.l.b16 %v219
  %v236 = vunpack.c.l.b16 %v220
  %v237 = vpack.c.b16 %v230, %v229
  %v238 = vpack.c.b16 %v232, %v231
  %v239 = vpack.c.b16 %v234, %v233
  %v240 = vpack.c.b16 %v236, %v235
  %vm245 = vcmask 523264
  %v247 = vsel %vm245, %v75, 0
  %v250 = vsel %vm245, %v76, 0
  %252 = vmatprep.subr.bf16.mxu0 0
  %253 = vmatpush1.bf16.msra.mxu0 %v237
  %254 = vmatprep.subr.bf16.mxu0 0
  %255 = vmatpush1.bf16.msra.mxu0 %v238
  %256 = vmatprep.subr.bf16.mxu0 0
  %257 = vmatpush1.bf16.msra.mxu0 %v239
  %258 = vmatprep.subr.bf16.mxu0 0
  %259 = vmatpush1.bf16.msra.mxu0 %v240
  %260 = vmatprep.subr.bf16.mxu0 0
  %261 = vmatpush1.bf16.msra.mxu0 0
  %262 = vmatprep.subr.bf16.mxu0 0
  %263 = vmatpush1.bf16.msra.mxu0 0
  %264 = vmatprep.subr.bf16.mxu0 0
  %265 = vmatpush1.bf16.msra.mxu0 0
  %266 = vmatprep.subr.bf16.mxu0 0
  %267 = vmatpush1.bf16.msra.mxu0 0
  %268 = vmatprep.subr.bf16.mxu0 0
  %269 = vmatpush1.bf16.msra.mxu0 0
  %270 = vmatprep.subr.bf16.mxu0 0
  %271 = vmatpush1.bf16.msra.mxu0 0
  %272 = vmatprep.subr.bf16.mxu0 0
  %273 = vmatpush1.bf16.msra.mxu0 0
  %274 = vmatprep.subr.bf16.mxu0 0
  %275 = vmatpush1.bf16.msra.mxu0 0
  %276 = vmatprep.subr.bf16.mxu0 0
  %277 = vmatpush1.bf16.msra.mxu0 0
  %278 = vmatprep.subr.bf16.mxu0 0
  %279 = vmatpush1.bf16.msra.mxu0 0
  %280 = vmatprep.subr.bf16.mxu0 0
  %281 = vmatpush1.bf16.msra.mxu0 0
  %282 = vmatprep.subr.bf16.mxu0 0
  %283 = vmatpush1.bf16.msra.mxu0 0
  %284 = vmatprep.mubr.bf16.mxu0 0
  %285 = vmatmul.mubr.bf16.gmra.mrb[0].mxu0 %v247
  %v286 = vpop.f32.mrb[0].mxu0
  %v287 = vadd.f32 0.0, %v286
  %v288 = vpop.f32.mrb[0].mxu0
  %v289 = vpop.f32.mrb[0].mxu0
  %v290 = vadd.f32 0.0, %v289
  %v291 = vpop.f32.mrb[0].mxu0
  %292 = vmatprep.mubr.bf16.mxu0 0
  %293 = vmatmul.mubr.bf16.gmra.mrb[0].mxu0 %v250
  %v294 = vpop.f32.mrb[0].mxu0
  %v295 = vadd.f32 0.0, %v294
  %v296 = vpop.f32.mrb[0].mxu0
  %v297 = vpop.f32.mrb[0].mxu0
  %v298 = vadd.f32 0.0, %v297
  %v299 = vpop.f32.mrb[0].mxu0
  %300 = vdwg.mxu0
  %v309 = vunpack.c.l.b16 %v204
  %v310 = vunpack.c.l.b16 %v205
  %v311 = vunpack.c.l.b16 %v206
  %v312 = vunpack.c.l.b16 %v207
  %v313 = vunpack.c.l.b16 %v208
  %v314 = vunpack.c.l.b16 %v209
  %v315 = vunpack.c.l.b16 %v210
  %v316 = vunpack.c.l.b16 %v211
  %v317 = vpack.c.b16 %v310, %v309
  %v318 = vpack.c.b16 %v312, %v311
  %v319 = vpack.c.b16 %v314, %v313
  %v320 = vpack.c.b16 %v316, %v315
  %v326 = vsel %vm245, %v135, 0
  %v329 = vsel %vm245, %v136, 0
  %331 = vmatprep.subr.bf16.mxu0 0
  %332 = vmatpush1.bf16.msra.mxu0 %v317
  %333 = vmatprep.subr.bf16.mxu0 0
  %334 = vmatpush1.bf16.msra.mxu0 %v318
  %335 = vmatprep.subr.bf16.mxu0 0
  %336 = vmatpush1.bf16.msra.mxu0 %v319
  %337 = vmatprep.subr.bf16.mxu0 0
  %338 = vmatpush1.bf16.msra.mxu0 %v320
  %339 = vmatprep.subr.bf16.mxu0 0
  %340 = vmatpush1.bf16.msra.mxu0 0
  %341 = vmatprep.subr.bf16.mxu0 0
  %342 = vmatpush1.bf16.msra.mxu0 0
  %343 = vmatprep.subr.bf16.mxu0 0
  %344 = vmatpush1.bf16.msra.mxu0 0
  %345 = vmatprep.subr.bf16.mxu0 0
  %346 = vmatpush1.bf16.msra.mxu0 0
  %347 = vmatprep.subr.bf16.mxu0 0
  %348 = vmatpush1.bf16.msra.mxu0 0
  %349 = vmatprep.subr.bf16.mxu0 0
  %350 = vmatpush1.bf16.msra.mxu0 0
  %351 = vmatprep.subr.bf16.mxu0 0
  %352 = vmatpush1.bf16.msra.mxu0 0
  %353 = vmatprep.subr.bf16.mxu0 0
  %354 = vmatpush1.bf16.msra.mxu0 0
  %355 = vmatprep.subr.bf16.mxu0 0
  %356 = vmatpush1.bf16.msra.mxu0 0
  %357 = vmatprep.subr.bf16.mxu0 0
  %358 = vmatpush1.bf16.msra.mxu0 0
  %359 = vmatprep.subr.bf16.mxu0 0
  %360 = vmatpush1.bf16.msra.mxu0 0
  %361 = vmatprep.subr.bf16.mxu0 0
  %362 = vmatpush1.bf16.msra.mxu0 0
  %363 = vmatprep.mubr.bf16.mxu0 0
  %364 = vmatmul.mubr.bf16.gmra.mrb[0].mxu0 %v326
  %v365 = vpop.f32.mrb[0].mxu0
  %v366 = vadd.f32 %v287, %v365
  %v367 = vpop.f32.mrb[0].mxu0
  %v368 = vpop.f32.mrb[0].mxu0
  %v369 = vadd.f32 %v290, %v368
  %v370 = vpop.f32.mrb[0].mxu0
  %371 = vmatprep.mubr.bf16.mxu0 0
  %372 = vmatmul.mubr.bf16.gmra.mrb[0].mxu0 %v329
  %v373 = vpop.f32.mrb[0].mxu0
  %v374 = vadd.f32 %v295, %v373
  %v375 = vpop.f32.mrb[0].mxu0
  %v376 = vpop.f32.mrb[0].mxu0
  %v377 = vadd.f32 %v298, %v376
  %v378 = vpop.f32.mrb[0].mxu0
  %379 = vdwg.mxu0
  %s380 = scalar_lea.vmem %s4, 64
  %v381 = vld [vmem:[%s380] sm:$0xf]
  %v382 = vld [vmem:[%s380 + $0x4] sm:$0xf]
  %v383 = vld [vmem:[%s380 + $0x8] sm:$0xf]
  %v384 = vld [vmem:[%s380 + $0xc] sm:$0xf]
  %v385 = vld [vmem:[%s380 + $0x10] sm:$0xf]
  %v386 = vld [vmem:[%s380 + $0x14] sm:$0xf]
  %v387 = vld [vmem:[%s380 + $0x18] sm:$0xf]
  %v388 = vld [vmem:[%s380 + $0x1c] sm:$0xf]
  %v397 = vunpack.c.l.b16 %v381
  %v398 = vunpack.c.l.b16 %v382
  %v399 = vunpack.c.l.b16 %v383
  %v400 = vunpack.c.l.b16 %v384
  %v401 = vunpack.c.l.b16 %v385
  %v402 = vunpack.c.l.b16 %v386
  %v403 = vunpack.c.l.b16 %v387
  %v404 = vunpack.c.l.b16 %v388
  %v405 = vpack.c.b16 %v398, %v397
  %v406 = vpack.c.b16 %v400, %v399
  %v407 = vpack.c.b16 %v402, %v401
  %v408 = vpack.c.b16 %v404, %v403
  %v414 = vsel %vm245, %v202, 0
  %v417 = vsel %vm245, %v203, 0
  %419 = vmatprep.subr.bf16.mxu0 0
  %420 = vmatpush1.bf16.msra.mxu0 %v405
  %421 = vmatprep.subr.bf16.mxu0 0
  %422 = vmatpush1.bf16.msra.mxu0 %v406
  %423 = vmatprep.subr.bf16.mxu0 0
  %424 = vmatpush1.bf16.msra.mxu0 %v407
  %425 = vmatprep.subr.bf16.mxu0 0
  %426 = vmatpush1.bf16.msra.mxu0 %v408
  %427 = vmatprep.subr.bf16.mxu0 0
  %428 = vmatpush1.bf16.msra.mxu0 0
  %429 = vmatprep.subr.bf16.mxu0 0
  %430 = vmatpush1.bf16.msra.mxu0 0
  %431 = vmatprep.subr.bf16.mxu0 0
  %432 = vmatpush1.bf16.msra.mxu0 0
  %433 = vmatprep.subr.bf16.mxu0 0
  %434 = vmatpush1.bf16.msra.mxu0 0
  %435 = vmatprep.subr.bf16.mxu0 0
  %436 = vmatpush1.bf16.msra.mxu0 0
  %437 = vmatprep.subr.bf16.mxu0 0
  %438 = vmatpush1.bf16.msra.mxu0 0
  %439 = vmatprep.subr.bf16.mxu0 0
  %440 = vmatpush1.bf16.msra.mxu0 0
  %441 = vmatprep.subr.bf16.mxu0 0
  %442 = vmatpush1.bf16.msra.mxu0 0
  %443 = vmatprep.subr.bf16.mxu0 0
  %444 = vmatpush1.bf16.msra.mxu0 0
  %445 = vmatprep.subr.bf16.mxu0 0
  %446 = vmatpush1.bf16.msra.mxu0 0
  %447 = vmatprep.subr.bf16.mxu0 0
  %448 = vmatpush1.bf16.msra.mxu0 0
  %449 = vmatprep.subr.bf16.mxu0 0
  %450 = vmatpush1.bf16.msra.mxu0 0
  %451 = vmatprep.mubr.bf16.mxu0 0
  %452 = vmatmul.mubr.bf16.gmra.mrb[0].mxu0 %v414
  %v453 = vpop.f32.mrb[0].mxu0
  %v454 = vadd.f32 0.0, %v453
  %v455 = vpop.f32.mrb[0].mxu0
  %v456 = vpop.f32.mrb[0].mxu0
  %v457 = vadd.f32 0.0, %v456
  %v458 = vpop.f32.mrb[0].mxu0
  %459 = vmatprep.mubr.bf16.mxu0 0
  %460 = vmatmul.mubr.bf16.gmra.mrb[0].mxu0 %v417
  %v461 = vpop.f32.mrb[0].mxu0
  %v462 = vadd.f32 0.0, %v461
  %v463 = vpop.f32.mrb[0].mxu0
  %v464 = vpop.f32.mrb[0].mxu0
  %v465 = vadd.f32 0.0, %v464
  %v466 = vpop.f32.mrb[0].mxu0
  %467 = vdwg.mxu0
  %v468 = vadd.f32 %v366, %v454
  %v469 = vadd.f32 %v369, %v457
  %v470 = vadd.f32 %v374, %v462
  %v471 = vadd.f32 %v377, %v465
  %v472 = vadd.f32 %v468, %v469
  %v473 = vadd.f32 %v472, %v470
  %v474 = vadd.f32 %v473, %v471
  %v475 = vrot.slane %v474, 4
  %v476 = vadd.f32 %v474, %v475
  %v477 = vrot.slane %v476, 2
  %v478 = vadd.f32 %v476, %v477
  %v479 = vrot.slane %v478, 1
  %v480 = vadd.f32 %v478, %v479
  %v481 = vmul.f32 %v468, %v468
  %v482 = vmul.f32 %v469, %v469
  %v483 = vmul.f32 %v470, %v470
  %v484 = vmul.f32 %v471, %v471
  %v485 = vadd.f32 %v481, %v482
  %v486 = vadd.f32 %v485, %v483
  %v487 = vadd.f32 %v486, %v484
  %v488 = vrot.slane %v487, 4
  %v489 = vadd.f32 %v487, %v488
  %v490 = vrot.slane %v489, 2
  %v491 = vadd.f32 %v489, %v490
  %v492 = vrot.slane %v491, 1
  %v493 = vadd.f32 %v491, %v492
  %v494 = vld [vmem:[%s9] sm:$0xff]
  %v495 = vld [vmem:[%s9 + $0x8] sm:$0xff]
  %v496 = vld [vmem:[%s9 + $0x10] sm:$0xff]
  %v497 = vld [vmem:[%s9 + $0x18] sm:$0xff]
  %v498 = vld [vmem:[%s9 + $0x20] sm:$0xff]
  %v499 = vld [vmem:[%s9 + $0x28] sm:$0xff]
  %v500 = vld [vmem:[%s9 + $0x30] sm:$0xff]
  %v501 = vld [vmem:[%s9 + $0x38] sm:$0xff]
  %v502 = vld [vmem:[%s9 + $0x40] sm:$0xff]
  %v503 = vld [vmem:[%s9 + $0x48] sm:$0xff]
  %v504 = vld [vmem:[%s9 + $0x50] sm:$0xff]
  %v505 = vld [vmem:[%s9 + $0x58] sm:$0xff]
  %v506 = vld [vmem:[%s9 + $0x60] sm:$0xff]
  %v507 = vld [vmem:[%s9 + $0x68] sm:$0xff]
  %v508 = vld [vmem:[%s9 + $0x70] sm:$0xff]
  %v509 = vld [vmem:[%s9 + $0x78] sm:$0xff]
  %510 = vmatprep.subr.mxu0 0.0
  %511 = vmatpush1.msra.mxu0 %v494
  %512 = vmatprep.subr.mxu0 0.0
  %513 = vmatpush1.msra.mxu0 %v495
  %514 = vmatprep.subr.mxu0 0.0
  %515 = vmatpush1.msra.mxu0 %v496
  %516 = vmatprep.subr.mxu0 0.0
  %517 = vmatpush1.msra.mxu0 %v497
  %518 = vmatprep.subr.mxu0 0.0
  %519 = vmatpush1.msra.mxu0 %v498
  %520 = vmatprep.subr.mxu0 0.0
  %521 = vmatpush1.msra.mxu0 %v499
  %522 = vmatprep.subr.mxu0 0.0
  %523 = vmatpush1.msra.mxu0 %v500
  %524 = vmatprep.subr.mxu0 0.0
  %525 = vmatpush1.msra.mxu0 %v501
  %526 = vmatprep.subr.mxu0 0.0
  %527 = vmatpush1.msra.mxu0 %v502
  %528 = vmatprep.subr.mxu0 0.0
  %529 = vmatpush1.msra.mxu0 %v503
  %530 = vmatprep.subr.mxu0 0.0
  %531 = vmatpush1.msra.mxu0 %v504
  %532 = vmatprep.subr.mxu0 0.0
  %533 = vmatpush1.msra.mxu0 %v505
  %534 = vmatprep.subr.mxu0 0.0
  %535 = vmatpush1.msra.mxu0 %v506
  %536 = vmatprep.subr.mxu0 0.0
  %537 = vmatpush1.msra.mxu0 %v507
  %538 = vmatprep.subr.mxu0 0.0
  %539 = vmatpush1.msra.mxu0 %v508
  %540 = vmatprep.subr.mxu0 0.0
  %541 = vmatpush1.msra.mxu0 %v509
  %542 = vmatprep.subr.mxu0 0.0
  %543 = vmatpush1.msra.mxu0 0.0
  %544 = vmatprep.subr.mxu0 0.0
  %545 = vmatpush1.msra.mxu0 0.0
  %546 = vmatprep.subr.mxu0 0.0
  %547 = vmatpush1.msra.mxu0 0.0
  %548 = vmatprep.subr.mxu0 0.0
  %549 = vmatpush1.msra.mxu0 0.0
  %550 = vmatprep.subr.mxu0 0.0
  %551 = vmatpush1.msra.mxu0 0.0
  %552 = vmatprep.subr.mxu0 0.0
  %553 = vmatpush1.msra.mxu0 0.0
  %554 = vmatprep.subr.mxu0 0.0
  %555 = vmatpush1.msra.mxu0 0.0
  %556 = vmatprep.subr.mxu0 0.0
  %557 = vmatpush1.msra.mxu0 0.0
  %558 = vmatprep.subr.mxu0 0.0
  %559 = vmatpush1.msra.mxu0 0.0
  %560 = vmatprep.subr.mxu0 0.0
  %561 = vmatpush1.msra.mxu0 0.0
  %562 = vmatprep.subr.mxu0 0.0
  %563 = vmatpush1.msra.mxu0 0.0
  %564 = vmatprep.subr.mxu0 0.0
  %565 = vmatpush1.msra.mxu0 0.0
  %566 = vmatprep.subr.mxu0 0.0
  %567 = vmatpush1.msra.mxu0 0.0
  %568 = vmatprep.subr.mxu0 0.0
  %569 = vmatpush1.msra.mxu0 0.0
  %570 = vmatprep.subr.mxu0 0.0
  %571 = vmatpush1.msra.mxu0 0.0
  %572 = vmatprep.subr.mxu0 0.0
  %573 = vmatpush1.msra.mxu0 0.0
  %574 = vmatprep.mubr.f32.mxu0 0.0
  %575 = vmatmul.mubr.f32.gmra.mrb[0].mxu0 %v480
  %v576 = vpop.f32.mrb[0].mxu0
  %v577 = vadd.f32 0.0, %v576
  %v578 = vpop.f32.mrb[0].mxu0
  %579 = vdwg.mxu0
  %v580 = vmul.f32 %v577, 0.001953125
  %581 = vmatprep.subr.mxu0 0.0
  %582 = vmatpush1.msra.mxu0 %v494
  %583 = vmatprep.subr.mxu0 0.0
  %584 = vmatpush1.msra.mxu0 %v495
  %585 = vmatprep.subr.mxu0 0.0
  %586 = vmatpush1.msra.mxu0 %v496
  %587 = vmatprep.subr.mxu0 0.0
  %588 = vmatpush1.msra.mxu0 %v497
  %589 = vmatprep.subr.mxu0 0.0
  %590 = vmatpush1.msra.mxu0 %v498
  %591 = vmatprep.subr.mxu0 0.0
  %592 = vmatpush1.msra.mxu0 %v499
  %593 = vmatprep.subr.mxu0 0.0
  %594 = vmatpush1.msra.mxu0 %v500
  %595 = vmatprep.subr.mxu0 0.0
  %596 = vmatpush1.msra.mxu0 %v501
  %597 = vmatprep.subr.mxu0 0.0
  %598 = vmatpush1.msra.mxu0 %v502
  %599 = vmatprep.subr.mxu0 0.0
  %600 = vmatpush1.msra.mxu0 %v503
  %601 = vmatprep.subr.mxu0 0.0
  %602 = vmatpush1.msra.mxu0 %v504
  %603 = vmatprep.subr.mxu0 0.0
  %604 = vmatpush1.msra.mxu0 %v505
  %605 = vmatprep.subr.mxu0 0.0
  %606 = vmatpush1.msra.mxu0 %v506
  %607 = vmatprep.subr.mxu0 0.0
  %608 = vmatpush1.msra.mxu0 %v507
  %609 = vmatprep.subr.mxu0 0.0
  %610 = vmatpush1.msra.mxu0 %v508
  %611 = vmatprep.subr.mxu0 0.0
  %612 = vmatpush1.msra.mxu0 %v509
  %613 = vmatprep.subr.mxu0 0.0
  %614 = vmatpush1.msra.mxu0 0.0
  %615 = vmatprep.subr.mxu0 0.0
  %616 = vmatpush1.msra.mxu0 0.0
  %617 = vmatprep.subr.mxu0 0.0
  %618 = vmatpush1.msra.mxu0 0.0
  %619 = vmatprep.subr.mxu0 0.0
  %620 = vmatpush1.msra.mxu0 0.0
  %621 = vmatprep.subr.mxu0 0.0
  %622 = vmatpush1.msra.mxu0 0.0
  %623 = vmatprep.subr.mxu0 0.0
  %624 = vmatpush1.msra.mxu0 0.0
  %625 = vmatprep.subr.mxu0 0.0
  %626 = vmatpush1.msra.mxu0 0.0
  %627 = vmatprep.subr.mxu0 0.0
  %628 = vmatpush1.msra.mxu0 0.0
  %629 = vmatprep.subr.mxu0 0.0
  %630 = vmatpush1.msra.mxu0 0.0
  %631 = vmatprep.subr.mxu0 0.0
  %632 = vmatpush1.msra.mxu0 0.0
  %633 = vmatprep.subr.mxu0 0.0
  %634 = vmatpush1.msra.mxu0 0.0
  %635 = vmatprep.subr.mxu0 0.0
  %636 = vmatpush1.msra.mxu0 0.0
  %637 = vmatprep.subr.mxu0 0.0
  %638 = vmatpush1.msra.mxu0 0.0
  %639 = vmatprep.subr.mxu0 0.0
  %640 = vmatpush1.msra.mxu0 0.0
  %641 = vmatprep.subr.mxu0 0.0
  %642 = vmatpush1.msra.mxu0 0.0
  %643 = vmatprep.subr.mxu0 0.0
  %644 = vmatpush1.msra.mxu0 0.0
  %645 = vmatprep.mubr.f32.mxu0 0.0
  %646 = vmatmul.mubr.f32.gmra.mrb[0].mxu0 %v493
  %v647 = vpop.f32.mrb[0].mxu0
  %v648 = vadd.f32 0.0, %v647
  %v649 = vpop.f32.mrb[0].mxu0
  %650 = vdwg.mxu0
  %v651 = vmul.f32 %v648, 0.001953125
  %v652 = vmul.f32 %v580, %v580
  %v653 = vsub.f32 %v651, %v652
  %v654 = vmax.f32 %v653, 0.0
  %v655 = vadd.f32 %v654, 1e-05
  %v656 = vrsqrt.pop %v655
  %v657 = vld [vmem:[%s10] sm:$0xff]
  %vm658 = vcmask 64512
  %v660 = vsel %vm658, %v656, 0
  %662 = vmatprep.subr.mxu0 0.0
  %663 = vmatpush1.msra.mxu0 %v657
  %664 = vmatprep.subr.mxu0 0.0
  %665 = vmatpush1.msra.mxu0 0.0
  %666 = vmatprep.subr.mxu0 0.0
  %667 = vmatpush1.msra.mxu0 0.0
  %668 = vmatprep.subr.mxu0 0.0
  %669 = vmatpush1.msra.mxu0 0.0
  %670 = vmatprep.subr.mxu0 0.0
  %671 = vmatpush1.msra.mxu0 0.0
  %672 = vmatprep.subr.mxu0 0.0
  %673 = vmatpush1.msra.mxu0 0.0
  %674 = vmatprep.subr.mxu0 0.0
  %675 = vmatpush1.msra.mxu0 0.0
  %676 = vmatprep.subr.mxu0 0.0
  %677 = vmatpush1.msra.mxu0 0.0
  %678 = vmatprep.subr.mxu0 0.0
  %679 = vmatpush1.msra.mxu0 0.0
  %680 = vmatprep.subr.mxu0 0.0
  %681 = vmatpush1.msra.mxu0 0.0
  %682 = vmatprep.subr.mxu0 0.0
  %683 = vmatpush1.msra.mxu0 0.0
  %684 = vmatprep.subr.mxu0 0.0
  %685 = vmatpush1.msra.mxu0 0.0
  %686 = vmatprep.subr.mxu0 0.0
  %687 = vmatpush1.msra.mxu0 0.0
  %688 = vmatprep.subr.mxu0 0.0
  %689 = vmatpush1.msra.mxu0 0.0
  %690 = vmatprep.subr.mxu0 0.0
  %691 = vmatpush1.msra.mxu0 0.0
  %692 = vmatprep.subr.mxu0 0.0
  %693 = vmatpush1.msra.mxu0 0.0
  %694 = vmatprep.subr.mxu0 0.0
  %695 = vmatpush1.msra.mxu0 0.0
  %696 = vmatprep.subr.mxu0 0.0
  %697 = vmatpush1.msra.mxu0 0.0
  %698 = vmatprep.subr.mxu0 0.0
  %699 = vmatpush1.msra.mxu0 0.0
  %700 = vmatprep.subr.mxu0 0.0
  %701 = vmatpush1.msra.mxu0 0.0
  %702 = vmatprep.subr.mxu0 0.0
  %703 = vmatpush1.msra.mxu0 0.0
  %704 = vmatprep.subr.mxu0 0.0
  %705 = vmatpush1.msra.mxu0 0.0
  %706 = vmatprep.subr.mxu0 0.0
  %707 = vmatpush1.msra.mxu0 0.0
  %708 = vmatprep.subr.mxu0 0.0
  %709 = vmatpush1.msra.mxu0 0.0
  %710 = vmatprep.subr.mxu0 0.0
  %711 = vmatpush1.msra.mxu0 0.0
  %712 = vmatprep.subr.mxu0 0.0
  %713 = vmatpush1.msra.mxu0 0.0
  %714 = vmatprep.subr.mxu0 0.0
  %715 = vmatpush1.msra.mxu0 0.0
  %716 = vmatprep.subr.mxu0 0.0
  %717 = vmatpush1.msra.mxu0 0.0
  %718 = vmatprep.subr.mxu0 0.0
  %719 = vmatpush1.msra.mxu0 0.0
  %720 = vmatprep.subr.mxu0 0.0
  %721 = vmatpush1.msra.mxu0 0.0
  %722 = vmatprep.subr.mxu0 0.0
  %723 = vmatpush1.msra.mxu0 0.0
  %724 = vmatprep.subr.mxu0 0.0
  %725 = vmatpush1.msra.mxu0 0.0
  %726 = vmatprep.mubr.f32.mxu0 0.0
  %727 = vmatmul.mubr.f32.gmra.mrb[0].mxu0 %v660
  %v728 = vpop.f32.mrb[0].mxu0
  %v729 = vadd.f32 0.0, %v728
  %v730 = vpop.f32.mrb[0].mxu0
  %731 = vdwg.mxu0
  %v732 = vsub.f32 0.0, %v580
  %v733 = vmul.f32 %v732, %v656
  %v735 = vsel %vm658, %v733, 0
  %737 = vmatprep.subr.mxu0 0.0
  %738 = vmatpush1.msra.mxu0 %v657
  %739 = vmatprep.subr.mxu0 0.0
  %740 = vmatpush1.msra.mxu0 0.0
  %741 = vmatprep.subr.mxu0 0.0
  %742 = vmatpush1.msra.mxu0 0.0
  %743 = vmatprep.subr.mxu0 0.0
  %744 = vmatpush1.msra.mxu0 0.0
  %745 = vmatprep.subr.mxu0 0.0
  %746 = vmatpush1.msra.mxu0 0.0
  %747 = vmatprep.subr.mxu0 0.0
  %748 = vmatpush1.msra.mxu0 0.0
  %749 = vmatprep.subr.mxu0 0.0
  %750 = vmatpush1.msra.mxu0 0.0
  %751 = vmatprep.subr.mxu0 0.0
  %752 = vmatpush1.msra.mxu0 0.0
  %753 = vmatprep.subr.mxu0 0.0
  %754 = vmatpush1.msra.mxu0 0.0
  %755 = vmatprep.subr.mxu0 0.0
  %756 = vmatpush1.msra.mxu0 0.0
  %757 = vmatprep.subr.mxu0 0.0
  %758 = vmatpush1.msra.mxu0 0.0
  %759 = vmatprep.subr.mxu0 0.0
  %760 = vmatpush1.msra.mxu0 0.0
  %761 = vmatprep.subr.mxu0 0.0
  %762 = vmatpush1.msra.mxu0 0.0
  %763 = vmatprep.subr.mxu0 0.0
  %764 = vmatpush1.msra.mxu0 0.0
  %765 = vmatprep.subr.mxu0 0.0
  %766 = vmatpush1.msra.mxu0 0.0
  %767 = vmatprep.subr.mxu0 0.0
  %768 = vmatpush1.msra.mxu0 0.0
  %769 = vmatprep.subr.mxu0 0.0
  %770 = vmatpush1.msra.mxu0 0.0
  %771 = vmatprep.subr.mxu0 0.0
  %772 = vmatpush1.msra.mxu0 0.0
  %773 = vmatprep.subr.mxu0 0.0
  %774 = vmatpush1.msra.mxu0 0.0
  %775 = vmatprep.subr.mxu0 0.0
  %776 = vmatpush1.msra.mxu0 0.0
  %777 = vmatprep.subr.mxu0 0.0
  %778 = vmatpush1.msra.mxu0 0.0
  %779 = vmatprep.subr.mxu0 0.0
  %780 = vmatpush1.msra.mxu0 0.0
  %781 = vmatprep.subr.mxu0 0.0
  %782 = vmatpush1.msra.mxu0 0.0
  %783 = vmatprep.subr.mxu0 0.0
  %784 = vmatpush1.msra.mxu0 0.0
  %785 = vmatprep.subr.mxu0 0.0
  %786 = vmatpush1.msra.mxu0 0.0
  %787 = vmatprep.subr.mxu0 0.0
  %788 = vmatpush1.msra.mxu0 0.0
  %789 = vmatprep.subr.mxu0 0.0
  %790 = vmatpush1.msra.mxu0 0.0
  %791 = vmatprep.subr.mxu0 0.0
  %792 = vmatpush1.msra.mxu0 0.0
  %793 = vmatprep.subr.mxu0 0.0
  %794 = vmatpush1.msra.mxu0 0.0
  %795 = vmatprep.subr.mxu0 0.0
  %796 = vmatpush1.msra.mxu0 0.0
  %797 = vmatprep.subr.mxu0 0.0
  %798 = vmatpush1.msra.mxu0 0.0
  %799 = vmatprep.subr.mxu0 0.0
  %800 = vmatpush1.msra.mxu0 0.0
  %801 = vmatprep.mubr.f32.mxu0 0.0
  %802 = vmatmul.mubr.f32.gmra.mrb[0].mxu0 %v735
  %v803 = vpop.f32.mrb[0].mxu0
  %v804 = vadd.f32 0.0, %v803
  %v805 = vpop.f32.mrb[0].mxu0
  %806 = vdwg.mxu0
  %v807 = vlaneseq
  %v808 = vshrl.u32 %v807, 7
  %v809 = vsub.s32 0, %v808
  %v810 = vrot.slane %v729, %v809
  %v811 = vmul.f32 %v468, %v810
  %v812 = vmul.f32 %v469, %v810
  %v813 = vmul.f32 %v470, %v810
  %v814 = vmul.f32 %v471, %v810
  %v815 = vlaneseq
  %v816 = vshrl.u32 %v815, 7
  %v817 = vsub.s32 0, %v816
  %v818 = vrot.slane %v804, %v817
  %v819 = vadd.f32 %v811, %v818
  %v820 = vadd.f32 %v812, %v818
  %v821 = vadd.f32 %v813, %v818
  %v822 = vadd.f32 %v814, %v818
  %v823 = vmax.f32 %v819, 0.0
  %v824 = vmax.f32 %v820, 0.0
  %v825 = vmax.f32 %v821, 0.0
  %v826 = vmax.f32 %v822, 0.0
  %v827 = vpack.c.bf16 %v824, %v823
  %v828 = vpack.c.bf16 %v826, %v825
  %829 = vmatprep.subr.bf16.mxu0 0
  %830 = vmatpush1.bf16.msra.mxu0 %v827
  %831 = vmatprep.subr.bf16.mxu0 0
  %832 = vmatpush1.bf16.msra.mxu0 %v828
  %833 = vmatprep.subr.bf16.mxu0 0
  %834 = vmatpush1.bf16.msra.mxu0 0
  %835 = vmatprep.subr.bf16.mxu0 0
  %836 = vmatpush1.bf16.msra.mxu0 0
  %837 = vmatprep.subr.bf16.mxu0 0
  %838 = vmatpush1.bf16.msra.mxu0 0
  %839 = vmatprep.subr.bf16.mxu0 0
  %840 = vmatpush1.bf16.msra.mxu0 0
  %841 = vmatprep.subr.bf16.mxu0 0
  %842 = vmatpush1.bf16.msra.mxu0 0
  %843 = vmatprep.subr.bf16.mxu0 0
  %844 = vmatpush1.bf16.msra.mxu0 0
  %845 = vmatprep.subr.bf16.mxu0 0
  %846 = vmatpush1.bf16.msra.mxu0 0
  %847 = vmatprep.subr.bf16.mxu0 0
  %848 = vmatpush1.bf16.msra.mxu0 0
  %849 = vmatprep.subr.bf16.mxu0 0
  %850 = vmatpush1.bf16.msra.mxu0 0
  %851 = vmatprep.subr.bf16.mxu0 0
  %852 = vmatpush1.bf16.msra.mxu0 0
  %853 = vmatprep.subr.bf16.mxu0 0
  %854 = vmatpush1.bf16.msra.mxu0 0
  %855 = vmatprep.subr.bf16.mxu0 0
  %856 = vmatpush1.bf16.msra.mxu0 0
  %857 = vmatprep.subr.bf16.mxu0 0
  %858 = vmatpush1.bf16.msra.mxu0 0
  %859 = vmatprep.subr.bf16.mxu0 0
  %860 = vmatpush1.bf16.msra.mxu0 0
  %861 = vmatprep.mubr.bf16.mxu0 0
  %862 = vmatmul.mubr.bf16.gmra.mrb[0].mxu0 %v81
  %v863 = vpop.f32.mrb[0].mxu0
  %v864 = vadd.f32 0.0, %v863
  %v865 = vpop.f32.mrb[0].mxu0
  %v866 = vpop.f32.mrb[0].mxu0
  %v867 = vadd.f32 0.0, %v866
  %v868 = vpop.f32.mrb[0].mxu0
  %869 = vmatprep.mubr.bf16.mxu0 0
  %870 = vmatmul.mubr.bf16.gmra.mrb[0].mxu0 %v84
  %v871 = vpop.f32.mrb[0].mxu0
  %v872 = vadd.f32 0.0, %v871
  %v873 = vpop.f32.mrb[0].mxu0
  %v874 = vpop.f32.mrb[0].mxu0
  %v875 = vadd.f32 0.0, %v874
  %v876 = vpop.f32.mrb[0].mxu0
  %877 = vdwg.mxu0
  %v878 = vpack.c.bf16 %v867, %v864
  %v879 = vpack.c.bf16 %v875, %v872
  %880 = vmatprep.subr.bf16.mxu0 0
  %881 = vmatpush1.bf16.msra.mxu0 %v827
  %882 = vmatprep.subr.bf16.mxu0 0
  %883 = vmatpush1.bf16.msra.mxu0 %v828
  %884 = vmatprep.subr.bf16.mxu0 0
  %885 = vmatpush1.bf16.msra.mxu0 0
  %886 = vmatprep.subr.bf16.mxu0 0
  %887 = vmatpush1.bf16.msra.mxu0 0
  %888 = vmatprep.subr.bf16.mxu0 0
  %889 = vmatpush1.bf16.msra.mxu0 0
  %890 = vmatprep.subr.bf16.mxu0 0
  %891 = vmatpush1.bf16.msra.mxu0 0
  %892 = vmatprep.subr.bf16.mxu0 0
  %893 = vmatpush1.bf16.msra.mxu0 0
  %894 = vmatprep.subr.bf16.mxu0 0
  %895 = vmatpush1.bf16.msra.mxu0 0
  %896 = vmatprep.subr.bf16.mxu0 0
  %897 = vmatpush1.bf16.msra.mxu0 0
  %898 = vmatprep.subr.bf16.mxu0 0
  %899 = vmatpush1.bf16.msra.mxu0 0
  %900 = vmatprep.subr.bf16.mxu0 0
  %901 = vmatpush1.bf16.msra.mxu0 0
  %902 = vmatprep.subr.bf16.mxu0 0
  %903 = vmatpush1.bf16.msra.mxu0 0
  %904 = vmatprep.subr.bf16.mxu0 0
  %905 = vmatpush1.bf16.msra.mxu0 0
  %906 = vmatprep.subr.bf16.mxu0 0
  %907 = vmatpush1.bf16.msra.mxu0 0
  %908 = vmatprep.subr.bf16.mxu0 0
  %909 = vmatpush1.bf16.msra.mxu0 0
  %910 = vmatprep.subr.bf16.mxu0 0
  %911 = vmatpush1.bf16.msra.mxu0 0
  %912 = vmatprep.mubr.bf16.mxu0 0
  %913 = vmatmul.mubr.bf16.gmra.mrb[0].mxu0 %v148
  %v914 = vpop.f32.mrb[0].mxu0
  %v915 = vadd.f32 0.0, %v914
  %v916 = vpop.f32.mrb[0].mxu0
  %v917 = vpop.f32.mrb[0].mxu0
  %v918 = vadd.f32 0.0, %v917
  %v919 = vpop.f32.mrb[0].mxu0
  %920 = vmatprep.mubr.bf16.mxu0 0
  %921 = vmatmul.mubr.bf16.gmra.mrb[0].mxu0 %v151
  %v922 = vpop.f32.mrb[0].mxu0
  %v923 = vadd.f32 0.0, %v922
  %v924 = vpop.f32.mrb[0].mxu0
  %v925 = vpop.f32.mrb[0].mxu0
  %v926 = vadd.f32 0.0, %v925
  %v927 = vpop.f32.mrb[0].mxu0
  %928 = vdwg.mxu0
  %v929 = vpack.c.bf16 %v918, %v915
  %v930 = vpack.c.bf16 %v926, %v923
  %v931 = vld [vmem:[%s5] sm:$0xff]
  %v932 = vld [vmem:[%s5 + $0x8] sm:$0xff]
  %v933 = vld [vmem:[%s5 + $0x10] sm:$0xff]
  %v934 = vld [vmem:[%s5 + $0x18] sm:$0xff]
  %v935 = vld [vmem:[%s5 + $0x20] sm:$0xff]
  %v936 = vld [vmem:[%s5 + $0x28] sm:$0xff]
  %v937 = vld [vmem:[%s5 + $0x30] sm:$0xff]
  %v938 = vld [vmem:[%s5 + $0x38] sm:$0xff]
  %v939 = vld [vmem:[%s5 + $0x40] sm:$0xff]
  %v940 = vld [vmem:[%s5 + $0x48] sm:$0xff]
  %v941 = vld [vmem:[%s5 + $0x50] sm:$0xff]
  %v942 = vld [vmem:[%s5 + $0x58] sm:$0xff]
  %v943 = vld [vmem:[%s5 + $0x60] sm:$0xff]
  %v944 = vld [vmem:[%s5 + $0x68] sm:$0xff]
  %v945 = vld [vmem:[%s5 + $0x70] sm:$0xff]
  %v946 = vld [vmem:[%s5 + $0x78] sm:$0xff]
  %s947 = scalar_lea.vmem %s5, 128
  %v948 = vld [vmem:[%s947] sm:$0xff]
  %v949 = vld [vmem:[%s947 + $0x8] sm:$0xff]
  %v950 = vld [vmem:[%s947 + $0x10] sm:$0xff]
  %v951 = vld [vmem:[%s947 + $0x18] sm:$0xff]
  %v952 = vld [vmem:[%s947 + $0x20] sm:$0xff]
  %v953 = vld [vmem:[%s947 + $0x28] sm:$0xff]
  %v954 = vld [vmem:[%s947 + $0x30] sm:$0xff]
  %v955 = vld [vmem:[%s947 + $0x38] sm:$0xff]
  %v956 = vld [vmem:[%s947 + $0x40] sm:$0xff]
  %v957 = vld [vmem:[%s947 + $0x48] sm:$0xff]
  %v958 = vld [vmem:[%s947 + $0x50] sm:$0xff]
  %v959 = vld [vmem:[%s947 + $0x58] sm:$0xff]
  %v960 = vld [vmem:[%s947 + $0x60] sm:$0xff]
  %v961 = vld [vmem:[%s947 + $0x68] sm:$0xff]
  %v962 = vld [vmem:[%s947 + $0x70] sm:$0xff]
  %v963 = vld [vmem:[%s947 + $0x78] sm:$0xff]
  %v980 = vunpack.c.l.b16 %v948
  %v981 = vunpack.c.h.b16 %v948
  %v982 = vunpack.c.l.b16 %v949
  %v983 = vunpack.c.h.b16 %v949
  %v984 = vunpack.c.l.b16 %v950
  %v985 = vunpack.c.h.b16 %v950
  %v986 = vunpack.c.l.b16 %v951
  %v987 = vunpack.c.h.b16 %v951
  %v988 = vunpack.c.l.b16 %v952
  %v989 = vunpack.c.h.b16 %v952
  %v990 = vunpack.c.l.b16 %v953
  %v991 = vunpack.c.h.b16 %v953
  %v992 = vunpack.c.l.b16 %v954
  %v993 = vunpack.c.h.b16 %v954
  %v994 = vunpack.c.l.b16 %v955
  %v995 = vunpack.c.h.b16 %v955
  %v996 = vunpack.c.l.b16 %v956
  %v997 = vunpack.c.h.b16 %v956
  %v998 = vunpack.c.l.b16 %v957
  %v999 = vunpack.c.h.b16 %v957
  %v1000 = vunpack.c.l.b16 %v958
  %v1001 = vunpack.c.h.b16 %v958
  %v1002 = vunpack.c.l.b16 %v959
  %v1003 = vunpack.c.h.b16 %v959
  %v1004 = vunpack.c.l.b16 %v960
  %v1005 = vunpack.c.h.b16 %v960
  %v1006 = vunpack.c.l.b16 %v961
  %v1007 = vunpack.c.h.b16 %v961
  %v1008 = vunpack.c.l.b16 %v962
  %v1009 = vunpack.c.h.b16 %v962
  %v1010 = vunpack.c.l.b16 %v963
  %v1011 = vunpack.c.h.b16 %v963
  %v1012 = vpack.c.b16 %v982, %v980
  %v1013 = vpack.c.b16 %v983, %v981
  %v1014 = vpack.c.b16 %v986, %v984
  %v1015 = vpack.c.b16 %v987, %v985
  %v1016 = vpack.c.b16 %v990, %v988
  %v1017 = vpack.c.b16 %v991, %v989
  %v1018 = vpack.c.b16 %v994, %v992
  %v1019 = vpack.c.b16 %v995, %v993
  %v1020 = vpack.c.b16 %v998, %v996
  %v1021 = vpack.c.b16 %v999, %v997
  %v1022 = vpack.c.b16 %v1002, %v1000
  %v1023 = vpack.c.b16 %v1003, %v1001
  %v1024 = vpack.c.b16 %v1006, %v1004
  %v1025 = vpack.c.b16 %v1007, %v1005
  %v1026 = vpack.c.b16 %v1010, %v1008
  %v1027 = vpack.c.b16 %v1011, %v1009
  %1044 = vmatprep.subr.bf16.mxu0 %v1013
  %1045 = vmatpush1.bf16.msra.mxu0 %v1012
  %1046 = vmatprep.subr.bf16.mxu0 %v1015
  %1047 = vmatpush1.bf16.msra.mxu0 %v1014
  %1048 = vmatprep.subr.bf16.mxu0 %v1017
  %1049 = vmatpush1.bf16.msra.mxu0 %v1016
  %1050 = vmatprep.subr.bf16.mxu0 %v1019
  %1051 = vmatpush1.bf16.msra.mxu0 %v1018
  %1052 = vmatprep.subr.bf16.mxu0 %v1021
  %1053 = vmatpush1.bf16.msra.mxu0 %v1020
  %1054 = vmatprep.subr.bf16.mxu0 %v1023
  %1055 = vmatpush1.bf16.msra.mxu0 %v1022
  %1056 = vmatprep.subr.bf16.mxu0 %v1025
  %1057 = vmatpush1.bf16.msra.mxu0 %v1024
  %1058 = vmatprep.subr.bf16.mxu0 %v1027
  %1059 = vmatpush1.bf16.msra.mxu0 %v1026
  %1060 = vmatprep.subr.bf16.mxu0 0
  %1061 = vmatpush1.bf16.msra.mxu0 0
  %1062 = vmatprep.subr.bf16.mxu0 0
  %1063 = vmatpush1.bf16.msra.mxu0 0
  %1064 = vmatprep.subr.bf16.mxu0 0
  %1065 = vmatpush1.bf16.msra.mxu0 0
  %1066 = vmatprep.subr.bf16.mxu0 0
  %1067 = vmatpush1.bf16.msra.mxu0 0
  %1068 = vmatprep.subr.bf16.mxu0 0
  %1069 = vmatpush1.bf16.msra.mxu0 0
  %1070 = vmatprep.subr.bf16.mxu0 0
  %1071 = vmatpush1.bf16.msra.mxu0 0
  %1072 = vmatprep.subr.bf16.mxu0 0
  %1073 = vmatpush1.bf16.msra.mxu0 0
  %1074 = vmatprep.subr.bf16.mxu0 0
  %1075 = vmatpush1.bf16.msra.mxu0 0
  %1076 = vmatprep.mubr.bf16.mxu0 0
  %1077 = vmatmul.mubr.bf16.gmra.mrb[0].mxu0 %v827
  %v1078 = vpop.f32.mrb[0].mxu0
  %v1079 = vadd.f32 0.0, %v1078
  %v1080 = vpop.f32.mrb[0].mxu0
  %v1081 = vadd.f32 0.0, %v1080
  %v1082 = vpop.f32.mrb[0].mxu0
  %v1083 = vadd.f32 0.0, %v1082
  %v1084 = vpop.f32.mrb[0].mxu0
  %v1085 = vadd.f32 0.0, %v1084
  %1086 = vmatprep.mubr.bf16.mxu0 0
  %1087 = vmatmul.mubr.bf16.gmra.mrb[0].mxu0 %v828
  %v1088 = vpop.f32.mrb[0].mxu0
  %v1089 = vadd.f32 0.0, %v1088
  %v1090 = vpop.f32.mrb[0].mxu0
  %v1091 = vadd.f32 0.0, %v1090
  %v1092 = vpop.f32.mrb[0].mxu0
  %v1093 = vadd.f32 0.0, %v1092
  %v1094 = vpop.f32.mrb[0].mxu0
  %v1095 = vadd.f32 0.0, %v1094
  %1096 = vdwg.mxu0
  %v1113 = vunpack.c.l.b16 %v931
  %v1114 = vunpack.c.h.b16 %v931
  %v1115 = vunpack.c.l.b16 %v932
  %v1116 = vunpack.c.h.b16 %v932
  %v1117 = vunpack.c.l.b16 %v933
  %v1118 = vunpack.c.h.b16 %v933
  %v1119 = vunpack.c.l.b16 %v934
  %v1120 = vunpack.c.h.b16 %v934
  %v1121 = vunpack.c.l.b16 %v935
  %v1122 = vunpack.c.h.b16 %v935
  %v1123 = vunpack.c.l.b16 %v936
  %v1124 = vunpack.c.h.b16 %v936
  %v1125 = vunpack.c.l.b16 %v937
  %v1126 = vunpack.c.h.b16 %v937
  %v1127 = vunpack.c.l.b16 %v938
  %v1128 = vunpack.c.h.b16 %v938
  %v1129 = vunpack.c.l.b16 %v939
  %v1130 = vunpack.c.h.b16 %v939
  %v1131 = vunpack.c.l.b16 %v940
  %v1132 = vunpack.c.h.b16 %v940
  %v1133 = vunpack.c.l.b16 %v941
  %v1134 = vunpack.c.h.b16 %v941
  %v1135 = vunpack.c.l.b16 %v942
  %v1136 = vunpack.c.h.b16 %v942
  %v1137 = vunpack.c.l.b16 %v943
  %v1138 = vunpack.c.h.b16 %v943
  %v1139 = vunpack.c.l.b16 %v944
  %v1140 = vunpack.c.h.b16 %v944
  %v1141 = vunpack.c.l.b16 %v945
  %v1142 = vunpack.c.h.b16 %v945
  %v1143 = vunpack.c.l.b16 %v946
  %v1144 = vunpack.c.h.b16 %v946
  %v1145 = vpack.c.b16 %v1115, %v1113
  %v1146 = vpack.c.b16 %v1116, %v1114
  %v1147 = vpack.c.b16 %v1119, %v1117
  %v1148 = vpack.c.b16 %v1120, %v1118
  %v1149 = vpack.c.b16 %v1123, %v1121
  %v1150 = vpack.c.b16 %v1124, %v1122
  %v1151 = vpack.c.b16 %v1127, %v1125
  %v1152 = vpack.c.b16 %v1128, %v1126
  %v1153 = vpack.c.b16 %v1131, %v1129
  %v1154 = vpack.c.b16 %v1132, %v1130
  %v1155 = vpack.c.b16 %v1135, %v1133
  %v1156 = vpack.c.b16 %v1136, %v1134
  %v1157 = vpack.c.b16 %v1139, %v1137
  %v1158 = vpack.c.b16 %v1140, %v1138
  %v1159 = vpack.c.b16 %v1143, %v1141
  %v1160 = vpack.c.b16 %v1144, %v1142
  %1177 = vmatprep.subr.bf16.mxu0 %v1146
  %1178 = vmatpush1.bf16.msra.mxu0 %v1145
  %1179 = vmatprep.subr.bf16.mxu0 %v1148
  %1180 = vmatpush1.bf16.msra.mxu0 %v1147
  %1181 = vmatprep.subr.bf16.mxu0 %v1150
  %1182 = vmatpush1.bf16.msra.mxu0 %v1149
  %1183 = vmatprep.subr.bf16.mxu0 %v1152
  %1184 = vmatpush1.bf16.msra.mxu0 %v1151
  %1185 = vmatprep.subr.bf16.mxu0 %v1154
  %1186 = vmatpush1.bf16.msra.mxu0 %v1153
  %1187 = vmatprep.subr.bf16.mxu0 %v1156
  %1188 = vmatpush1.bf16.msra.mxu0 %v1155
  %1189 = vmatprep.subr.bf16.mxu0 %v1158
  %1190 = vmatpush1.bf16.msra.mxu0 %v1157
  %1191 = vmatprep.subr.bf16.mxu0 %v1160
  %1192 = vmatpush1.bf16.msra.mxu0 %v1159
  %1193 = vmatprep.subr.bf16.mxu0 0
  %1194 = vmatpush1.bf16.msra.mxu0 0
  %1195 = vmatprep.subr.bf16.mxu0 0
  %1196 = vmatpush1.bf16.msra.mxu0 0
  %1197 = vmatprep.subr.bf16.mxu0 0
  %1198 = vmatpush1.bf16.msra.mxu0 0
  %1199 = vmatprep.subr.bf16.mxu0 0
  %1200 = vmatpush1.bf16.msra.mxu0 0
  %1201 = vmatprep.subr.bf16.mxu0 0
  %1202 = vmatpush1.bf16.msra.mxu0 0
  %1203 = vmatprep.subr.bf16.mxu0 0
  %1204 = vmatpush1.bf16.msra.mxu0 0
  %1205 = vmatprep.subr.bf16.mxu0 0
  %1206 = vmatpush1.bf16.msra.mxu0 0
  %1207 = vmatprep.subr.bf16.mxu0 0
  %1208 = vmatpush1.bf16.msra.mxu0 0
  %1209 = vmatprep.mubr.bf16.mxu0 0
  %1210 = vmatmul.mubr.bf16.gmra.mrb[0].mxu0 %v878
  %v1211 = vpop.f32.mrb[0].mxu0
  %v1212 = vadd.f32 %v1079, %v1211
  %v1213 = vpop.f32.mrb[0].mxu0
  %v1214 = vadd.f32 %v1081, %v1213
  %v1215 = vpop.f32.mrb[0].mxu0
  %v1216 = vadd.f32 %v1083, %v1215
  %v1217 = vpop.f32.mrb[0].mxu0
  %v1218 = vadd.f32 %v1085, %v1217
  %1219 = vmatprep.mubr.bf16.mxu0 0
  %1220 = vmatmul.mubr.bf16.gmra.mrb[0].mxu0 %v879
  %v1221 = vpop.f32.mrb[0].mxu0
  %v1222 = vadd.f32 %v1089, %v1221
  %v1223 = vpop.f32.mrb[0].mxu0
  %v1224 = vadd.f32 %v1091, %v1223
  %v1225 = vpop.f32.mrb[0].mxu0
  %v1226 = vadd.f32 %v1093, %v1225
  %v1227 = vpop.f32.mrb[0].mxu0
  %v1228 = vadd.f32 %v1095, %v1227
  %1229 = vdwg.mxu0
  %s1230 = scalar_lea.vmem %s5, 256
  %v1231 = vld [vmem:[%s1230] sm:$0xff]
  %v1232 = vld [vmem:[%s1230 + $0x8] sm:$0xff]
  %v1233 = vld [vmem:[%s1230 + $0x10] sm:$0xff]
  %v1234 = vld [vmem:[%s1230 + $0x18] sm:$0xff]
  %v1235 = vld [vmem:[%s1230 + $0x20] sm:$0xff]
  %v1236 = vld [vmem:[%s1230 + $0x28] sm:$0xff]
  %v1237 = vld [vmem:[%s1230 + $0x30] sm:$0xff]
  %v1238 = vld [vmem:[%s1230 + $0x38] sm:$0xff]
  %v1239 = vld [vmem:[%s1230 + $0x40] sm:$0xff]
  %v1240 = vld [vmem:[%s1230 + $0x48] sm:$0xff]
  %v1241 = vld [vmem:[%s1230 + $0x50] sm:$0xff]
  %v1242 = vld [vmem:[%s1230 + $0x58] sm:$0xff]
  %v1243 = vld [vmem:[%s1230 + $0x60] sm:$0xff]
  %v1244 = vld [vmem:[%s1230 + $0x68] sm:$0xff]
  %v1245 = vld [vmem:[%s1230 + $0x70] sm:$0xff]
  %v1246 = vld [vmem:[%s1230 + $0x78] sm:$0xff]
  %v1263 = vunpack.c.l.b16 %v1231
  %v1264 = vunpack.c.h.b16 %v1231
  %v1265 = vunpack.c.l.b16 %v1232
  %v1266 = vunpack.c.h.b16 %v1232
  %v1267 = vunpack.c.l.b16 %v1233
  %v1268 = vunpack.c.h.b16 %v1233
  %v1269 = vunpack.c.l.b16 %v1234
  %v1270 = vunpack.c.h.b16 %v1234
  %v1271 = vunpack.c.l.b16 %v1235
  %v1272 = vunpack.c.h.b16 %v1235
  %v1273 = vunpack.c.l.b16 %v1236
  %v1274 = vunpack.c.h.b16 %v1236
  %v1275 = vunpack.c.l.b16 %v1237
  %v1276 = vunpack.c.h.b16 %v1237
  %v1277 = vunpack.c.l.b16 %v1238
  %v1278 = vunpack.c.h.b16 %v1238
  %v1279 = vunpack.c.l.b16 %v1239
  %v1280 = vunpack.c.h.b16 %v1239
  %v1281 = vunpack.c.l.b16 %v1240
  %v1282 = vunpack.c.h.b16 %v1240
  %v1283 = vunpack.c.l.b16 %v1241
  %v1284 = vunpack.c.h.b16 %v1241
  %v1285 = vunpack.c.l.b16 %v1242
  %v1286 = vunpack.c.h.b16 %v1242
  %v1287 = vunpack.c.l.b16 %v1243
  %v1288 = vunpack.c.h.b16 %v1243
  %v1289 = vunpack.c.l.b16 %v1244
  %v1290 = vunpack.c.h.b16 %v1244
  %v1291 = vunpack.c.l.b16 %v1245
  %v1292 = vunpack.c.h.b16 %v1245
  %v1293 = vunpack.c.l.b16 %v1246
  %v1294 = vunpack.c.h.b16 %v1246
  %v1295 = vpack.c.b16 %v1265, %v1263
  %v1296 = vpack.c.b16 %v1266, %v1264
  %v1297 = vpack.c.b16 %v1269, %v1267
  %v1298 = vpack.c.b16 %v1270, %v1268
  %v1299 = vpack.c.b16 %v1273, %v1271
  %v1300 = vpack.c.b16 %v1274, %v1272
  %v1301 = vpack.c.b16 %v1277, %v1275
  %v1302 = vpack.c.b16 %v1278, %v1276
  %v1303 = vpack.c.b16 %v1281, %v1279
  %v1304 = vpack.c.b16 %v1282, %v1280
  %v1305 = vpack.c.b16 %v1285, %v1283
  %v1306 = vpack.c.b16 %v1286, %v1284
  %v1307 = vpack.c.b16 %v1289, %v1287
  %v1308 = vpack.c.b16 %v1290, %v1288
  %v1309 = vpack.c.b16 %v1293, %v1291
  %v1310 = vpack.c.b16 %v1294, %v1292
  %1327 = vmatprep.subr.bf16.mxu0 %v1296
  %1328 = vmatpush1.bf16.msra.mxu0 %v1295
  %1329 = vmatprep.subr.bf16.mxu0 %v1298
  %1330 = vmatpush1.bf16.msra.mxu0 %v1297
  %1331 = vmatprep.subr.bf16.mxu0 %v1300
  %1332 = vmatpush1.bf16.msra.mxu0 %v1299
  %1333 = vmatprep.subr.bf16.mxu0 %v1302
  %1334 = vmatpush1.bf16.msra.mxu0 %v1301
  %1335 = vmatprep.subr.bf16.mxu0 %v1304
  %1336 = vmatpush1.bf16.msra.mxu0 %v1303
  %1337 = vmatprep.subr.bf16.mxu0 %v1306
  %1338 = vmatpush1.bf16.msra.mxu0 %v1305
  %1339 = vmatprep.subr.bf16.mxu0 %v1308
  %1340 = vmatpush1.bf16.msra.mxu0 %v1307
  %1341 = vmatprep.subr.bf16.mxu0 %v1310
  %1342 = vmatpush1.bf16.msra.mxu0 %v1309
  %1343 = vmatprep.subr.bf16.mxu0 0
  %1344 = vmatpush1.bf16.msra.mxu0 0
  %1345 = vmatprep.subr.bf16.mxu0 0
  %1346 = vmatpush1.bf16.msra.mxu0 0
  %1347 = vmatprep.subr.bf16.mxu0 0
  %1348 = vmatpush1.bf16.msra.mxu0 0
  %1349 = vmatprep.subr.bf16.mxu0 0
  %1350 = vmatpush1.bf16.msra.mxu0 0
  %1351 = vmatprep.subr.bf16.mxu0 0
  %1352 = vmatpush1.bf16.msra.mxu0 0
  %1353 = vmatprep.subr.bf16.mxu0 0
  %1354 = vmatpush1.bf16.msra.mxu0 0
  %1355 = vmatprep.subr.bf16.mxu0 0
  %1356 = vmatpush1.bf16.msra.mxu0 0
  %1357 = vmatprep.subr.bf16.mxu0 0
  %1358 = vmatpush1.bf16.msra.mxu0 0
  %1359 = vmatprep.mubr.bf16.mxu0 0
  %1360 = vmatmul.mubr.bf16.gmra.mrb[0].mxu0 %v929
  %v1361 = vpop.f32.mrb[0].mxu0
  %v1362 = vadd.f32 0.0, %v1361
  %v1363 = vpop.f32.mrb[0].mxu0
  %v1364 = vadd.f32 0.0, %v1363
  %v1365 = vpop.f32.mrb[0].mxu0
  %v1366 = vadd.f32 0.0, %v1365
  %v1367 = vpop.f32.mrb[0].mxu0
  %v1368 = vadd.f32 0.0, %v1367
  %1369 = vmatprep.mubr.bf16.mxu0 0
  %1370 = vmatmul.mubr.bf16.gmra.mrb[0].mxu0 %v930
  %v1371 = vpop.f32.mrb[0].mxu0
  %v1372 = vadd.f32 0.0, %v1371
  %v1373 = vpop.f32.mrb[0].mxu0
  %v1374 = vadd.f32 0.0, %v1373
  %v1375 = vpop.f32.mrb[0].mxu0
  %v1376 = vadd.f32 0.0, %v1375
  %v1377 = vpop.f32.mrb[0].mxu0
  %v1378 = vadd.f32 0.0, %v1377
  %1379 = vdwg.mxu0
  %v1380 = vadd.f32 %v1212, %v1362
  %v1381 = vadd.f32 %v1214, %v1364
  %v1382 = vadd.f32 %v1216, %v1366
  %v1383 = vadd.f32 %v1218, %v1368
  %v1384 = vadd.f32 %v1222, %v1372
  %v1385 = vadd.f32 %v1224, %v1374
  %v1386 = vadd.f32 %v1226, %v1376
  %v1387 = vadd.f32 %v1228, %v1378
  %v1388 = vld [vmem:[%s6] sm:$0x3]
  %v1390 = vlaneseq
  %v1391 = vshrl.u32 %v1390, 7
  %v1392 = vsub.s32 0, %v1391
  %v1393 = vrot.slane %v1388, %v1392
  %v1394 = vlaneseq
  %v1395 = vshrl.u32 %v1394, 7
  %v1396 = vsub.s32 1, %v1395
  %v1397 = vrot.slane %v1388, %v1396
  %v1400 = vadd.f32 %v1380, %v1393
  %v1401 = vadd.f32 %v1381, %v1397
  %v1402 = vadd.f32 %v1382, %v1393
  %v1403 = vadd.f32 %v1383, %v1397
  %v1404 = vadd.f32 %v1384, %v1393
  %v1405 = vadd.f32 %v1385, %v1397
  %v1406 = vadd.f32 %v1386, %v1393
  %v1407 = vadd.f32 %v1387, %v1397
  %v1408 = vld [vmem:[%s1] sm:$0xff]
  %v1409 = vld [vmem:[%s1 + $0x8] sm:$0xff]
  %v1410 = vld [vmem:[%s1 + $0x10] sm:$0xff]
  %v1411 = vld [vmem:[%s1 + $0x18] sm:$0xff]
  %v1412 = vld [vmem:[%s7] sm:$0xff]
  %v1413 = vld [vmem:[%s7 + $0x8] sm:$0xff]
  %v1414 = vld [vmem:[%s7 + $0x10] sm:$0xff]
  %v1415 = vld [vmem:[%s7 + $0x18] sm:$0xff]
  %v1416 = vld [vmem:[%s7 + $0x20] sm:$0xff]
  %v1417 = vld [vmem:[%s7 + $0x28] sm:$0xff]
  %v1418 = vld [vmem:[%s7 + $0x30] sm:$0xff]
  %v1419 = vld [vmem:[%s7 + $0x38] sm:$0xff]
  %v1420 = vld [vmem:[%s7 + $0x40] sm:$0xff]
  %v1421 = vld [vmem:[%s7 + $0x48] sm:$0xff]
  %v1422 = vld [vmem:[%s7 + $0x50] sm:$0xff]
  %v1423 = vld [vmem:[%s7 + $0x58] sm:$0xff]
  %v1424 = vld [vmem:[%s7 + $0x60] sm:$0xff]
  %v1425 = vld [vmem:[%s7 + $0x68] sm:$0xff]
  %v1426 = vld [vmem:[%s7 + $0x70] sm:$0xff]
  %v1427 = vld [vmem:[%s7 + $0x78] sm:$0xff]
  %v1428 = vld [vmem:[%s8] sm:$0xf]
  %v1430 = vlaneseq
  %v1431 = vshrl.u32 %v1430, 7
  %v1432 = vsub.s32 0, %v1431
  %v1433 = vrot.slane %v1428, %v1432
  %v1434 = vlaneseq
  %v1435 = vshrl.u32 %v1434, 7
  %v1436 = vsub.s32 1, %v1435
  %v1437 = vrot.slane %v1428, %v1436
  %v1438 = vlaneseq
  %v1439 = vshrl.u32 %v1438, 7
  %v1440 = vsub.s32 2, %v1439
  %v1441 = vrot.slane %v1428, %v1440
  %v1442 = vlaneseq
  %v1443 = vshrl.u32 %v1442, 7
  %v1444 = vsub.s32 3, %v1443
  %v1445 = vrot.slane %v1428, %v1444
  %v1451 = vsel %vm79, %v1408, 0
  %v1454 = vsel %vm79, %v1409, 0
  %v1457 = vsel %vm79, %v1410, 0
  %v1460 = vsel %vm79, %v1411, 0
  %1462 = vmatprep.subr.mxu0 %v1413
  %1463 = vmatpush1.msra.mxu0 %v1412
  %1464 = vmatprep.subr.mxu0 %v1417
  %1465 = vmatpush1.msra.mxu0 %v1416
  %1466 = vmatprep.subr.mxu0 %v1421
  %1467 = vmatpush1.msra.mxu0 %v1420
  %1468 = vmatprep.subr.mxu0 %v1425
  %1469 = vmatpush1.msra.mxu0 %v1424
  %1470 = vmatprep.subr.mxu0 0.0
  %1471 = vmatpush1.msra.mxu0 0.0
  %1472 = vmatprep.subr.mxu0 0.0
  %1473 = vmatpush1.msra.mxu0 0.0
  %1474 = vmatprep.subr.mxu0 0.0
  %1475 = vmatpush1.msra.mxu0 0.0
  %1476 = vmatprep.subr.mxu0 0.0
  %1477 = vmatpush1.msra.mxu0 0.0
  %1478 = vmatprep.subr.mxu0 0.0
  %1479 = vmatpush1.msra.mxu0 0.0
  %1480 = vmatprep.subr.mxu0 0.0
  %1481 = vmatpush1.msra.mxu0 0.0
  %1482 = vmatprep.subr.mxu0 0.0
  %1483 = vmatpush1.msra.mxu0 0.0
  %1484 = vmatprep.subr.mxu0 0.0
  %1485 = vmatpush1.msra.mxu0 0.0
  %1486 = vmatprep.subr.mxu0 0.0
  %1487 = vmatpush1.msra.mxu0 0.0
  %1488 = vmatprep.subr.mxu0 0.0
  %1489 = vmatpush1.msra.mxu0 0.0
  %1490 = vmatprep.subr.mxu0 0.0
  %1491 = vmatpush1.msra.mxu0 0.0
  %1492 = vmatprep.subr.mxu0 0.0
  %1493 = vmatpush1.msra.mxu0 0.0
  %1494 = vmatprep.subr.mxu0 0.0
  %1495 = vmatpush1.msra.mxu0 0.0
  %1496 = vmatprep.subr.mxu0 0.0
  %1497 = vmatpush1.msra.mxu0 0.0
  %1498 = vmatprep.subr.mxu0 0.0
  %1499 = vmatpush1.msra.mxu0 0.0
  %1500 = vmatprep.subr.mxu0 0.0
  %1501 = vmatpush1.msra.mxu0 0.0
  %1502 = vmatprep.subr.mxu0 0.0
  %1503 = vmatpush1.msra.mxu0 0.0
  %1504 = vmatprep.subr.mxu0 0.0
  %1505 = vmatpush1.msra.mxu0 0.0
  %1506 = vmatprep.subr.mxu0 0.0
  %1507 = vmatpush1.msra.mxu0 0.0
  %1508 = vmatprep.subr.mxu0 0.0
  %1509 = vmatpush1.msra.mxu0 0.0
  %1510 = vmatprep.subr.mxu0 0.0
  %1511 = vmatpush1.msra.mxu0 0.0
  %1512 = vmatprep.subr.mxu0 0.0
  %1513 = vmatpush1.msra.mxu0 0.0
  %1514 = vmatprep.subr.mxu0 0.0
  %1515 = vmatpush1.msra.mxu0 0.0
  %1516 = vmatprep.subr.mxu0 0.0
  %1517 = vmatpush1.msra.mxu0 0.0
  %1518 = vmatprep.subr.mxu0 0.0
  %1519 = vmatpush1.msra.mxu0 0.0
  %1520 = vmatprep.subr.mxu0 0.0
  %1521 = vmatpush1.msra.mxu0 0.0
  %1522 = vmatprep.subr.mxu0 0.0
  %1523 = vmatpush1.msra.mxu0 0.0
  %1524 = vmatprep.subr.mxu0 0.0
  %1525 = vmatpush1.msra.mxu0 0.0
  %1526 = vmatprep.mubr.f32.mxu0 0.0
  %1527 = vmatmul.mubr.f32.gmra.mrb[0].mxu0 %v1451
  %v1528 = vpop.f32.mrb[0].mxu0
  %v1529 = vadd.f32 %v1433, %v1528
  %v1530 = vpop.f32.mrb[0].mxu0
  %v1531 = vadd.f32 %v1437, %v1530
  %1532 = vmatprep.mubr.f32.mxu0 0.0
  %1533 = vmatmul.mubr.f32.gmra.mrb[0].mxu0 %v1454
  %v1534 = vpop.f32.mrb[0].mxu0
  %v1535 = vadd.f32 %v1433, %v1534
  %v1536 = vpop.f32.mrb[0].mxu0
  %v1537 = vadd.f32 %v1437, %v1536
  %1538 = vmatprep.mubr.f32.mxu0 0.0
  %1539 = vmatmul.mubr.f32.gmra.mrb[0].mxu0 %v1457
  %v1540 = vpop.f32.mrb[0].mxu0
  %v1541 = vadd.f32 %v1433, %v1540
  %v1542 = vpop.f32.mrb[0].mxu0
  %v1543 = vadd.f32 %v1437, %v1542
  %1544 = vmatprep.mubr.f32.mxu0 0.0
  %1545 = vmatmul.mubr.f32.gmra.mrb[0].mxu0 %v1460
  %v1546 = vpop.f32.mrb[0].mxu0
  %v1547 = vadd.f32 %v1433, %v1546
  %v1548 = vpop.f32.mrb[0].mxu0
  %v1549 = vadd.f32 %v1437, %v1548
  %1550 = vdwg.mxu0
  %1551 = vmatprep.subr.mxu0 %v1415
  %1552 = vmatpush1.msra.mxu0 %v1414
  %1553 = vmatprep.subr.mxu0 %v1419
  %1554 = vmatpush1.msra.mxu0 %v1418
  %1555 = vmatprep.subr.mxu0 %v1423
  %1556 = vmatpush1.msra.mxu0 %v1422
  %1557 = vmatprep.subr.mxu0 %v1427
  %1558 = vmatpush1.msra.mxu0 %v1426
  %1559 = vmatprep.subr.mxu0 0.0
  %1560 = vmatpush1.msra.mxu0 0.0
  %1561 = vmatprep.subr.mxu0 0.0
  %1562 = vmatpush1.msra.mxu0 0.0
  %1563 = vmatprep.subr.mxu0 0.0
  %1564 = vmatpush1.msra.mxu0 0.0
  %1565 = vmatprep.subr.mxu0 0.0
  %1566 = vmatpush1.msra.mxu0 0.0
  %1567 = vmatprep.subr.mxu0 0.0
  %1568 = vmatpush1.msra.mxu0 0.0
  %1569 = vmatprep.subr.mxu0 0.0
  %1570 = vmatpush1.msra.mxu0 0.0
  %1571 = vmatprep.subr.mxu0 0.0
  %1572 = vmatpush1.msra.mxu0 0.0
  %1573 = vmatprep.subr.mxu0 0.0
  %1574 = vmatpush1.msra.mxu0 0.0
  %1575 = vmatprep.subr.mxu0 0.0
  %1576 = vmatpush1.msra.mxu0 0.0
  %1577 = vmatprep.subr.mxu0 0.0
  %1578 = vmatpush1.msra.mxu0 0.0
  %1579 = vmatprep.subr.mxu0 0.0
  %1580 = vmatpush1.msra.mxu0 0.0
  %1581 = vmatprep.subr.mxu0 0.0
  %1582 = vmatpush1.msra.mxu0 0.0
  %1583 = vmatprep.subr.mxu0 0.0
  %1584 = vmatpush1.msra.mxu0 0.0
  %1585 = vmatprep.subr.mxu0 0.0
  %1586 = vmatpush1.msra.mxu0 0.0
  %1587 = vmatprep.subr.mxu0 0.0
  %1588 = vmatpush1.msra.mxu0 0.0
  %1589 = vmatprep.subr.mxu0 0.0
  %1590 = vmatpush1.msra.mxu0 0.0
  %1591 = vmatprep.subr.mxu0 0.0
  %1592 = vmatpush1.msra.mxu0 0.0
  %1593 = vmatprep.subr.mxu0 0.0
  %1594 = vmatpush1.msra.mxu0 0.0
  %1595 = vmatprep.subr.mxu0 0.0
  %1596 = vmatpush1.msra.mxu0 0.0
  %1597 = vmatprep.subr.mxu0 0.0
  %1598 = vmatpush1.msra.mxu0 0.0
  %1599 = vmatprep.subr.mxu0 0.0
  %1600 = vmatpush1.msra.mxu0 0.0
  %1601 = vmatprep.subr.mxu0 0.0
  %1602 = vmatpush1.msra.mxu0 0.0
  %1603 = vmatprep.subr.mxu0 0.0
  %1604 = vmatpush1.msra.mxu0 0.0
  %1605 = vmatprep.subr.mxu0 0.0
  %1606 = vmatpush1.msra.mxu0 0.0
  %1607 = vmatprep.subr.mxu0 0.0
  %1608 = vmatpush1.msra.mxu0 0.0
  %1609 = vmatprep.subr.mxu0 0.0
  %1610 = vmatpush1.msra.mxu0 0.0
  %1611 = vmatprep.subr.mxu0 0.0
  %1612 = vmatpush1.msra.mxu0 0.0
  %1613 = vmatprep.subr.mxu0 0.0
  %1614 = vmatpush1.msra.mxu0 0.0
  %1615 = vmatprep.mubr.f32.mxu0 0.0
  %1616 = vmatmul.mubr.f32.gmra.mrb[0].mxu0 %v1451
  %v1617 = vpop.f32.mrb[0].mxu0
  %v1618 = vadd.f32 %v1441, %v1617
  %v1619 = vpop.f32.mrb[0].mxu0
  %v1620 = vadd.f32 %v1445, %v1619
  %1621 = vmatprep.mubr.f32.mxu0 0.0
  %1622 = vmatmul.mubr.f32.gmra.mrb[0].mxu0 %v1454
  %v1623 = vpop.f32.mrb[0].mxu0
  %v1624 = vadd.f32 %v1441, %v1623
  %v1625 = vpop.f32.mrb[0].mxu0
  %v1626 = vadd.f32 %v1445, %v1625
  %1627 = vmatprep.mubr.f32.mxu0 0.0
  %1628 = vmatmul.mubr.f32.gmra.mrb[0].mxu0 %v1457
  %v1629 = vpop.f32.mrb[0].mxu0
  %v1630 = vadd.f32 %v1441, %v1629
  %v1631 = vpop.f32.mrb[0].mxu0
  %v1632 = vadd.f32 %v1445, %v1631
  %1633 = vmatprep.mubr.f32.mxu0 0.0
  %1634 = vmatmul.mubr.f32.gmra.mrb[0].mxu0 %v1460
  %v1635 = vpop.f32.mrb[0].mxu0
  %v1636 = vadd.f32 %v1441, %v1635
  %v1637 = vpop.f32.mrb[0].mxu0
  %v1638 = vadd.f32 %v1445, %v1637
  %1639 = vdwg.mxu0
  %v1640 = vmul.f32 %v1400, %v1529
  %v1641 = vmul.f32 %v1401, %v1531
  %v1642 = vmul.f32 %v1402, %v1535
  %v1643 = vmul.f32 %v1403, %v1537
  %v1644 = vmul.f32 %v1404, %v1541
  %v1645 = vmul.f32 %v1405, %v1543
  %v1646 = vmul.f32 %v1406, %v1547
  %v1647 = vmul.f32 %v1407, %v1549
  %v1648 = vadd.f32 %v1640, %v1618
  %v1649 = vadd.f32 %v1641, %v1620
  %v1650 = vadd.f32 %v1642, %v1624
  %v1651 = vadd.f32 %v1643, %v1626
  %v1652 = vadd.f32 %v1644, %v1630
  %v1653 = vadd.f32 %v1645, %v1632
  %v1654 = vadd.f32 %v1646, %v1636
  %v1655 = vadd.f32 %v1647, %v1638
  %v1656 = vadd.f32 %v1648, %v1650
  %v1657 = vadd.f32 %v1656, %v1652
  %v1658 = vadd.f32 %v1657, %v1654
  %v1659 = vrot.slane %v1658, 4
  %v1660 = vadd.f32 %v1658, %v1659
  %v1661 = vrot.slane %v1660, 2
  %v1662 = vadd.f32 %v1660, %v1661
  %v1663 = vrot.slane %v1662, 1
  %v1664 = vadd.f32 %v1662, %v1663
  %v1665 = vadd.f32 %v1649, %v1651
  %v1666 = vadd.f32 %v1665, %v1653
  %v1667 = vadd.f32 %v1666, %v1655
  %v1668 = vrot.slane %v1667, 4
  %v1669 = vadd.f32 %v1667, %v1668
  %v1670 = vrot.slane %v1669, 2
  %v1671 = vadd.f32 %v1669, %v1670
  %v1672 = vrot.slane %v1671, 1
  %v1673 = vadd.f32 %v1671, %v1672
  %v1674 = vmul.f32 %v1648, %v1648
  %v1675 = vmul.f32 %v1649, %v1649
  %v1676 = vmul.f32 %v1650, %v1650
  %v1677 = vmul.f32 %v1651, %v1651
  %v1678 = vmul.f32 %v1652, %v1652
  %v1679 = vmul.f32 %v1653, %v1653
  %v1680 = vmul.f32 %v1654, %v1654
  %v1681 = vmul.f32 %v1655, %v1655
  %v1682 = vadd.f32 %v1674, %v1676
  %v1683 = vadd.f32 %v1682, %v1678
  %v1684 = vadd.f32 %v1683, %v1680
  %v1685 = vrot.slane %v1684, 4
  %v1686 = vadd.f32 %v1684, %v1685
  %v1687 = vrot.slane %v1686, 2
  %v1688 = vadd.f32 %v1686, %v1687
  %v1689 = vrot.slane %v1688, 1
  %v1690 = vadd.f32 %v1688, %v1689
  %v1691 = vadd.f32 %v1675, %v1677
  %v1692 = vadd.f32 %v1691, %v1679
  %v1693 = vadd.f32 %v1692, %v1681
  %v1694 = vrot.slane %v1693, 4
  %v1695 = vadd.f32 %v1693, %v1694
  %v1696 = vrot.slane %v1695, 2
  %v1697 = vadd.f32 %v1695, %v1696
  %v1698 = vrot.slane %v1697, 1
  %v1699 = vadd.f32 %v1697, %v1698
  %v1700 = vld [vmem:[%s11] sm:$0xff]
  %v1701 = vld [vmem:[%s11 + $0x8] sm:$0xff]
  %v1702 = vld [vmem:[%s11 + $0x10] sm:$0xff]
  %v1703 = vld [vmem:[%s11 + $0x18] sm:$0xff]
  %v1704 = vld [vmem:[%s11 + $0x20] sm:$0xff]
  %v1705 = vld [vmem:[%s11 + $0x28] sm:$0xff]
  %v1706 = vld [vmem:[%s11 + $0x30] sm:$0xff]
  %v1707 = vld [vmem:[%s11 + $0x38] sm:$0xff]
  %v1708 = vld [vmem:[%s11 + $0x40] sm:$0xff]
  %v1709 = vld [vmem:[%s11 + $0x48] sm:$0xff]
  %v1710 = vld [vmem:[%s11 + $0x50] sm:$0xff]
  %v1711 = vld [vmem:[%s11 + $0x58] sm:$0xff]
  %v1712 = vld [vmem:[%s11 + $0x60] sm:$0xff]
  %v1713 = vld [vmem:[%s11 + $0x68] sm:$0xff]
  %v1714 = vld [vmem:[%s11 + $0x70] sm:$0xff]
  %v1715 = vld [vmem:[%s11 + $0x78] sm:$0xff]
  %v1716 = vld [vmem:[%s11 + $0x80] sm:$0xff]
  %v1717 = vld [vmem:[%s11 + $0x88] sm:$0xff]
  %v1718 = vld [vmem:[%s11 + $0x90] sm:$0xff]
  %v1719 = vld [vmem:[%s11 + $0x98] sm:$0xff]
  %v1720 = vld [vmem:[%s11 + $0xa0] sm:$0xff]
  %v1721 = vld [vmem:[%s11 + $0xa8] sm:$0xff]
  %v1722 = vld [vmem:[%s11 + $0xb0] sm:$0xff]
  %v1723 = vld [vmem:[%s11 + $0xb8] sm:$0xff]
  %v1724 = vld [vmem:[%s11 + $0xc0] sm:$0xff]
  %v1725 = vld [vmem:[%s11 + $0xc8] sm:$0xff]
  %v1726 = vld [vmem:[%s11 + $0xd0] sm:$0xff]
  %v1727 = vld [vmem:[%s11 + $0xd8] sm:$0xff]
  %v1728 = vld [vmem:[%s11 + $0xe0] sm:$0xff]
  %v1729 = vld [vmem:[%s11 + $0xe8] sm:$0xff]
  %v1730 = vld [vmem:[%s11 + $0xf0] sm:$0xff]
  %v1731 = vld [vmem:[%s11 + $0xf8] sm:$0xff]
  %1732 = vmatprep.subr.mxu0 0.0
  %1733 = vmatpush1.msra.mxu0 %v1700
  %1734 = vmatprep.subr.mxu0 0.0
  %1735 = vmatpush1.msra.mxu0 %v1701
  %1736 = vmatprep.subr.mxu0 0.0
  %1737 = vmatpush1.msra.mxu0 %v1702
  %1738 = vmatprep.subr.mxu0 0.0
  %1739 = vmatpush1.msra.mxu0 %v1703
  %1740 = vmatprep.subr.mxu0 0.0
  %1741 = vmatpush1.msra.mxu0 %v1704
  %1742 = vmatprep.subr.mxu0 0.0
  %1743 = vmatpush1.msra.mxu0 %v1705
  %1744 = vmatprep.subr.mxu0 0.0
  %1745 = vmatpush1.msra.mxu0 %v1706
  %1746 = vmatprep.subr.mxu0 0.0
  %1747 = vmatpush1.msra.mxu0 %v1707
  %1748 = vmatprep.subr.mxu0 0.0
  %1749 = vmatpush1.msra.mxu0 %v1708
  %1750 = vmatprep.subr.mxu0 0.0
  %1751 = vmatpush1.msra.mxu0 %v1709
  %1752 = vmatprep.subr.mxu0 0.0
  %1753 = vmatpush1.msra.mxu0 %v1710
  %1754 = vmatprep.subr.mxu0 0.0
  %1755 = vmatpush1.msra.mxu0 %v1711
  %1756 = vmatprep.subr.mxu0 0.0
  %1757 = vmatpush1.msra.mxu0 %v1712
  %1758 = vmatprep.subr.mxu0 0.0
  %1759 = vmatpush1.msra.mxu0 %v1713
  %1760 = vmatprep.subr.mxu0 0.0
  %1761 = vmatpush1.msra.mxu0 %v1714
  %1762 = vmatprep.subr.mxu0 0.0
  %1763 = vmatpush1.msra.mxu0 %v1715
  %1764 = vmatprep.subr.mxu0 0.0
  %1765 = vmatpush1.msra.mxu0 %v1716
  %1766 = vmatprep.subr.mxu0 0.0
  %1767 = vmatpush1.msra.mxu0 %v1717
  %1768 = vmatprep.subr.mxu0 0.0
  %1769 = vmatpush1.msra.mxu0 %v1718
  %1770 = vmatprep.subr.mxu0 0.0
  %1771 = vmatpush1.msra.mxu0 %v1719
  %1772 = vmatprep.subr.mxu0 0.0
  %1773 = vmatpush1.msra.mxu0 %v1720
  %1774 = vmatprep.subr.mxu0 0.0
  %1775 = vmatpush1.msra.mxu0 %v1721
  %1776 = vmatprep.subr.mxu0 0.0
  %1777 = vmatpush1.msra.mxu0 %v1722
  %1778 = vmatprep.subr.mxu0 0.0
  %1779 = vmatpush1.msra.mxu0 %v1723
  %1780 = vmatprep.subr.mxu0 0.0
  %1781 = vmatpush1.msra.mxu0 %v1724
  %1782 = vmatprep.subr.mxu0 0.0
  %1783 = vmatpush1.msra.mxu0 %v1725
  %1784 = vmatprep.subr.mxu0 0.0
  %1785 = vmatpush1.msra.mxu0 %v1726
  %1786 = vmatprep.subr.mxu0 0.0
  %1787 = vmatpush1.msra.mxu0 %v1727
  %1788 = vmatprep.subr.mxu0 0.0
  %1789 = vmatpush1.msra.mxu0 %v1728
  %1790 = vmatprep.subr.mxu0 0.0
  %1791 = vmatpush1.msra.mxu0 %v1729
  %1792 = vmatprep.subr.mxu0 0.0
  %1793 = vmatpush1.msra.mxu0 %v1730
  %1794 = vmatprep.subr.mxu0 0.0
  %1795 = vmatpush1.msra.mxu0 %v1731
  %1796 = vmatprep.mubr.f32.mxu0 %v1673
  %1797 = vmatmul.mubr.f32.gmra.mrb[0].mxu0 %v1664
  %v1798 = vpop.f32.mrb[0].mxu0
  %v1799 = vadd.f32 0.0, %v1798
  %v1800 = vpop.f32.mrb[0].mxu0
  %1801 = vdwg.mxu0
  %v1802 = vmul.f32 %v1799, 0.001953125
  %1803 = vmatprep.subr.mxu0 0.0
  %1804 = vmatpush1.msra.mxu0 %v1700
  %1805 = vmatprep.subr.mxu0 0.0
  %1806 = vmatpush1.msra.mxu0 %v1701
  %1807 = vmatprep.subr.mxu0 0.0
  %1808 = vmatpush1.msra.mxu0 %v1702
  %1809 = vmatprep.subr.mxu0 0.0
  %1810 = vmatpush1.msra.mxu0 %v1703
  %1811 = vmatprep.subr.mxu0 0.0
  %1812 = vmatpush1.msra.mxu0 %v1704
  %1813 = vmatprep.subr.mxu0 0.0
  %1814 = vmatpush1.msra.mxu0 %v1705
  %1815 = vmatprep.subr.mxu0 0.0
  %1816 = vmatpush1.msra.mxu0 %v1706
  %1817 = vmatprep.subr.mxu0 0.0
  %1818 = vmatpush1.msra.mxu0 %v1707
  %1819 = vmatprep.subr.mxu0 0.0
  %1820 = vmatpush1.msra.mxu0 %v1708
  %1821 = vmatprep.subr.mxu0 0.0
  %1822 = vmatpush1.msra.mxu0 %v1709
  %1823 = vmatprep.subr.mxu0 0.0
  %1824 = vmatpush1.msra.mxu0 %v1710
  %1825 = vmatprep.subr.mxu0 0.0
  %1826 = vmatpush1.msra.mxu0 %v1711
  %1827 = vmatprep.subr.mxu0 0.0
  %1828 = vmatpush1.msra.mxu0 %v1712
  %1829 = vmatprep.subr.mxu0 0.0
  %1830 = vmatpush1.msra.mxu0 %v1713
  %1831 = vmatprep.subr.mxu0 0.0
  %1832 = vmatpush1.msra.mxu0 %v1714
  %1833 = vmatprep.subr.mxu0 0.0
  %1834 = vmatpush1.msra.mxu0 %v1715
  %1835 = vmatprep.subr.mxu0 0.0
  %1836 = vmatpush1.msra.mxu0 %v1716
  %1837 = vmatprep.subr.mxu0 0.0
  %1838 = vmatpush1.msra.mxu0 %v1717
  %1839 = vmatprep.subr.mxu0 0.0
  %1840 = vmatpush1.msra.mxu0 %v1718
  %1841 = vmatprep.subr.mxu0 0.0
  %1842 = vmatpush1.msra.mxu0 %v1719
  %1843 = vmatprep.subr.mxu0 0.0
  %1844 = vmatpush1.msra.mxu0 %v1720
  %1845 = vmatprep.subr.mxu0 0.0
  %1846 = vmatpush1.msra.mxu0 %v1721
  %1847 = vmatprep.subr.mxu0 0.0
  %1848 = vmatpush1.msra.mxu0 %v1722
  %1849 = vmatprep.subr.mxu0 0.0
  %1850 = vmatpush1.msra.mxu0 %v1723
  %1851 = vmatprep.subr.mxu0 0.0
  %1852 = vmatpush1.msra.mxu0 %v1724
  %1853 = vmatprep.subr.mxu0 0.0
  %1854 = vmatpush1.msra.mxu0 %v1725
  %1855 = vmatprep.subr.mxu0 0.0
  %1856 = vmatpush1.msra.mxu0 %v1726
  %1857 = vmatprep.subr.mxu0 0.0
  %1858 = vmatpush1.msra.mxu0 %v1727
  %1859 = vmatprep.subr.mxu0 0.0
  %1860 = vmatpush1.msra.mxu0 %v1728
  %1861 = vmatprep.subr.mxu0 0.0
  %1862 = vmatpush1.msra.mxu0 %v1729
  %1863 = vmatprep.subr.mxu0 0.0
  %1864 = vmatpush1.msra.mxu0 %v1730
  %1865 = vmatprep.subr.mxu0 0.0
  %1866 = vmatpush1.msra.mxu0 %v1731
  %1867 = vmatprep.mubr.f32.mxu0 %v1699
  %1868 = vmatmul.mubr.f32.gmra.mrb[0].mxu0 %v1690
  %v1869 = vpop.f32.mrb[0].mxu0
  %v1870 = vadd.f32 0.0, %v1869
  %v1871 = vpop.f32.mrb[0].mxu0
  %1872 = vdwg.mxu0
  %v1873 = vmul.f32 %v1870, 0.001953125
  %v1874 = vmul.f32 %v1802, %v1802
  %v1875 = vsub.f32 %v1873, %v1874
  %v1876 = vmax.f32 %v1875, 0.0
  %v1877 = vadd.f32 %v1876, 1e-05
  %v1878 = vrsqrt.pop %v1877
  %v1879 = vld [vmem:[%s12] sm:$0xff]
  %v1880 = vld [vmem:[%s12 + $0x8] sm:$0xff]
  %v1881 = vld [vmem:[%s12 + $0x10] sm:$0xff]
  %v1882 = vld [vmem:[%s12 + $0x18] sm:$0xff]
  %vm1883 = vcmask 130048
  %v1885 = vsel %vm1883, %v1878, 0
  %1887 = vmatprep.subr.mxu0 %v1880
  %1888 = vmatpush1.msra.mxu0 %v1879
  %1889 = vmatprep.subr.mxu0 %v1882
  %1890 = vmatpush1.msra.mxu0 %v1881
  %1891 = vmatprep.subr.mxu0 0.0
  %1892 = vmatpush1.msra.mxu0 0.0
  %1893 = vmatprep.subr.mxu0 0.0
  %1894 = vmatpush1.msra.mxu0 0.0
  %1895 = vmatprep.subr.mxu0 0.0
  %1896 = vmatpush1.msra.mxu0 0.0
  %1897 = vmatprep.subr.mxu0 0.0
  %1898 = vmatpush1.msra.mxu0 0.0
  %1899 = vmatprep.subr.mxu0 0.0
  %1900 = vmatpush1.msra.mxu0 0.0
  %1901 = vmatprep.subr.mxu0 0.0
  %1902 = vmatpush1.msra.mxu0 0.0
  %1903 = vmatprep.subr.mxu0 0.0
  %1904 = vmatpush1.msra.mxu0 0.0
  %1905 = vmatprep.subr.mxu0 0.0
  %1906 = vmatpush1.msra.mxu0 0.0
  %1907 = vmatprep.subr.mxu0 0.0
  %1908 = vmatpush1.msra.mxu0 0.0
  %1909 = vmatprep.subr.mxu0 0.0
  %1910 = vmatpush1.msra.mxu0 0.0
  %1911 = vmatprep.subr.mxu0 0.0
  %1912 = vmatpush1.msra.mxu0 0.0
  %1913 = vmatprep.subr.mxu0 0.0
  %1914 = vmatpush1.msra.mxu0 0.0
  %1915 = vmatprep.subr.mxu0 0.0
  %1916 = vmatpush1.msra.mxu0 0.0
  %1917 = vmatprep.subr.mxu0 0.0
  %1918 = vmatpush1.msra.mxu0 0.0
  %1919 = vmatprep.subr.mxu0 0.0
  %1920 = vmatpush1.msra.mxu0 0.0
  %1921 = vmatprep.subr.mxu0 0.0
  %1922 = vmatpush1.msra.mxu0 0.0
  %1923 = vmatprep.subr.mxu0 0.0
  %1924 = vmatpush1.msra.mxu0 0.0
  %1925 = vmatprep.subr.mxu0 0.0
  %1926 = vmatpush1.msra.mxu0 0.0
  %1927 = vmatprep.subr.mxu0 0.0
  %1928 = vmatpush1.msra.mxu0 0.0
  %1929 = vmatprep.subr.mxu0 0.0
  %1930 = vmatpush1.msra.mxu0 0.0
  %1931 = vmatprep.subr.mxu0 0.0
  %1932 = vmatpush1.msra.mxu0 0.0
  %1933 = vmatprep.subr.mxu0 0.0
  %1934 = vmatpush1.msra.mxu0 0.0
  %1935 = vmatprep.subr.mxu0 0.0
  %1936 = vmatpush1.msra.mxu0 0.0
  %1937 = vmatprep.subr.mxu0 0.0
  %1938 = vmatpush1.msra.mxu0 0.0
  %1939 = vmatprep.subr.mxu0 0.0
  %1940 = vmatpush1.msra.mxu0 0.0
  %1941 = vmatprep.subr.mxu0 0.0
  %1942 = vmatpush1.msra.mxu0 0.0
  %1943 = vmatprep.subr.mxu0 0.0
  %1944 = vmatpush1.msra.mxu0 0.0
  %1945 = vmatprep.subr.mxu0 0.0
  %1946 = vmatpush1.msra.mxu0 0.0
  %1947 = vmatprep.subr.mxu0 0.0
  %1948 = vmatpush1.msra.mxu0 0.0
  %1949 = vmatprep.subr.mxu0 0.0
  %1950 = vmatpush1.msra.mxu0 0.0
  %1951 = vmatprep.mubr.f32.mxu0 0.0
  %1952 = vmatmul.mubr.f32.gmra.mrb[0].mxu0 %v1885
  %v1953 = vpop.f32.mrb[0].mxu0
  %v1954 = vadd.f32 0.0, %v1953
  %v1955 = vpop.f32.mrb[0].mxu0
  %v1956 = vadd.f32 0.0, %v1955
  %1957 = vdwg.mxu0
  %v1958 = vsub.f32 0.0, %v1802
  %v1959 = vmul.f32 %v1958, %v1878
  %v1961 = vsel %vm1883, %v1959, 0
  %1963 = vmatprep.subr.mxu0 %v1880
  %1964 = vmatpush1.msra.mxu0 %v1879
  %1965 = vmatprep.subr.mxu0 %v1882
  %1966 = vmatpush1.msra.mxu0 %v1881
  %1967 = vmatprep.subr.mxu0 0.0
  %1968 = vmatpush1.msra.mxu0 0.0
  %1969 = vmatprep.subr.mxu0 0.0
  %1970 = vmatpush1.msra.mxu0 0.0
  %1971 = vmatprep.subr.mxu0 0.0
  %1972 = vmatpush1.msra.mxu0 0.0
  %1973 = vmatprep.subr.mxu0 0.0
  %1974 = vmatpush1.msra.mxu0 0.0
  %1975 = vmatprep.subr.mxu0 0.0
  %1976 = vmatpush1.msra.mxu0 0.0
  %1977 = vmatprep.subr.mxu0 0.0
  %1978 = vmatpush1.msra.mxu0 0.0
  %1979 = vmatprep.subr.mxu0 0.0
  %1980 = vmatpush1.msra.mxu0 0.0
  %1981 = vmatprep.subr.mxu0 0.0
  %1982 = vmatpush1.msra.mxu0 0.0
  %1983 = vmatprep.subr.mxu0 0.0
  %1984 = vmatpush1.msra.mxu0 0.0
  %1985 = vmatprep.subr.mxu0 0.0
  %1986 = vmatpush1.msra.mxu0 0.0
  %1987 = vmatprep.subr.mxu0 0.0
  %1988 = vmatpush1.msra.mxu0 0.0
  %1989 = vmatprep.subr.mxu0 0.0
  %1990 = vmatpush1.msra.mxu0 0.0
  %1991 = vmatprep.subr.mxu0 0.0
  %1992 = vmatpush1.msra.mxu0 0.0
  %1993 = vmatprep.subr.mxu0 0.0
  %1994 = vmatpush1.msra.mxu0 0.0
  %1995 = vmatprep.subr.mxu0 0.0
  %1996 = vmatpush1.msra.mxu0 0.0
  %1997 = vmatprep.subr.mxu0 0.0
  %1998 = vmatpush1.msra.mxu0 0.0
  %1999 = vmatprep.subr.mxu0 0.0
  %2000 = vmatpush1.msra.mxu0 0.0
  %2001 = vmatprep.subr.mxu0 0.0
  %2002 = vmatpush1.msra.mxu0 0.0
  %2003 = vmatprep.subr.mxu0 0.0
  %2004 = vmatpush1.msra.mxu0 0.0
  %2005 = vmatprep.subr.mxu0 0.0
  %2006 = vmatpush1.msra.mxu0 0.0
  %2007 = vmatprep.subr.mxu0 0.0
  %2008 = vmatpush1.msra.mxu0 0.0
  %2009 = vmatprep.subr.mxu0 0.0
  %2010 = vmatpush1.msra.mxu0 0.0
  %2011 = vmatprep.subr.mxu0 0.0
  %2012 = vmatpush1.msra.mxu0 0.0
  %2013 = vmatprep.subr.mxu0 0.0
  %2014 = vmatpush1.msra.mxu0 0.0
  %2015 = vmatprep.subr.mxu0 0.0
  %2016 = vmatpush1.msra.mxu0 0.0
  %2017 = vmatprep.subr.mxu0 0.0
  %2018 = vmatpush1.msra.mxu0 0.0
  %2019 = vmatprep.subr.mxu0 0.0
  %2020 = vmatpush1.msra.mxu0 0.0
  %2021 = vmatprep.subr.mxu0 0.0
  %2022 = vmatpush1.msra.mxu0 0.0
  %2023 = vmatprep.subr.mxu0 0.0
  %2024 = vmatpush1.msra.mxu0 0.0
  %2025 = vmatprep.subr.mxu0 0.0
  %2026 = vmatpush1.msra.mxu0 0.0
  %2027 = vmatprep.mubr.f32.mxu0 0.0
  %2028 = vmatmul.mubr.f32.gmra.mrb[0].mxu0 %v1961
  %v2029 = vpop.f32.mrb[0].mxu0
  %v2030 = vadd.f32 0.0, %v2029
  %v2031 = vpop.f32.mrb[0].mxu0
  %v2032 = vadd.f32 0.0, %v2031
  %2033 = vdwg.mxu0
  %v2034 = vlaneseq
  %v2035 = vshrl.u32 %v2034, 7
  %v2036 = vsub.s32 0, %v2035
  %v2037 = vrot.slane %v1954, %v2036
  %v2038 = vlaneseq
  %v2039 = vshrl.u32 %v2038, 7
  %v2040 = vsub.s32 0, %v2039
  %v2041 = vrot.slane %v1956, %v2040
  %v2042 = vmul.f32 %v1648, %v2037
  %v2043 = vmul.f32 %v1649, %v2041
  %v2044 = vmul.f32 %v1650, %v2037
  %v2045 = vmul.f32 %v1651, %v2041
  %v2046 = vmul.f32 %v1652, %v2037
  %v2047 = vmul.f32 %v1653, %v2041
  %v2048 = vmul.f32 %v1654, %v2037
  %v2049 = vmul.f32 %v1655, %v2041
  %v2050 = vlaneseq
  %v2051 = vshrl.u32 %v2050, 7
  %v2052 = vsub.s32 0, %v2051
  %v2053 = vrot.slane %v2030, %v2052
  %v2054 = vlaneseq
  %v2055 = vshrl.u32 %v2054, 7
  %v2056 = vsub.s32 0, %v2055
  %v2057 = vrot.slane %v2032, %v2056
  %v2058 = vadd.f32 %v2042, %v2053
  %v2059 = vadd.f32 %v2043, %v2057
  %v2060 = vadd.f32 %v2044, %v2053
  %v2061 = vadd.f32 %v2045, %v2057
  %v2062 = vadd.f32 %v2046, %v2053
  %v2063 = vadd.f32 %v2047, %v2057
  %v2064 = vadd.f32 %v2048, %v2053
  %v2065 = vadd.f32 %v2049, %v2057
  %v2066 = vmax.f32 %v2058, 0.0
  %v2067 = vmax.f32 %v2059, 0.0
  %v2068 = vmax.f32 %v2060, 0.0
  %v2069 = vmax.f32 %v2061, 0.0
  %v2070 = vmax.f32 %v2062, 0.0
  %v2071 = vmax.f32 %v2063, 0.0
  %v2072 = vmax.f32 %v2064, 0.0
  %v2073 = vmax.f32 %v2065, 0.0
  %2074 = vst [vmem:[%s13] sm:$0xff] %v2066
  %2075 = vst [vmem:[%s13 + $0x8] sm:$0xff] %v2067
  %2076 = vst [vmem:[%s13 + $0x10] sm:$0xff] %v2068
  %2077 = vst [vmem:[%s13 + $0x18] sm:$0xff] %v2069
  %2078 = vst [vmem:[%s13 + $0x20] sm:$0xff] %v2070
  %2079 = vst [vmem:[%s13 + $0x28] sm:$0xff] %v2071
  %2080 = vst [vmem:[%s13 + $0x30] sm:$0xff] %v2072
  %2081 = vst [vmem:[%s13 + $0x38] sm:$0xff] %v2073
  // Predicated region
  $region54: #{film_forward.1} parent=0 // pred_check
    _
  $region55: #{film_forward.1} parent=0 // pred_check_branch
    %2083 = sbr.rel (0) target = $region57
  $region56: #{film_forward.1} parent=0 // pred_region
    _
  $region57: #{film_forward.1} parent=0 // pred_fallthru
    _
  // Predicated region
  $region58: #{film_forward.1} parent=0 // pred_check
    _
  $region59: #{film_forward.1} parent=0 // pred_check_branch
    %2085 = sbr.rel (0) target = $region61
  $region60: #{film_forward.1} parent=0 // pred_region
    _
  $region61: #{film_forward.1} parent=0 // pred_fallthru
    _

</llo_original>
